<compile_context>
chip_gen: v6e
topology: v6e:2x2x1
jax: 0.10.0
libtpu: 0.0.40
codegen_flags: <defaults>
</compile_context>

<pallas_src>
import functools

import jax
import jax.numpy as jnp
from jax.experimental import pallas as pl
from jax.experimental.pallas import tpu as pltpu


def _make_mha_kernel(num_heads, head_dim, n_batch, tgt_len, src_len, need_weights):
    embed_dim = num_heads * head_dim
    LN = tgt_len * n_batch
    SN = src_len * n_batch
    scaling = float(head_dim) ** -0.5

    def kernel(q_ref, k_ref, v_ref,
               wq_ref, wk_ref, wv_ref,
               bq_ref, bk_ref, bv_ref,
               wo_ref, bo_ref, mask_ref,
               *out_refs):
        out_ref = out_refs[0]
        wts_ref = out_refs[1] if need_weights else None

        # ---- Input projections: one full-width (rows, E) @ (E, E) matmul each ----
        q = jnp.dot(q_ref[...], wq_ref[...],
                    preferred_element_type=jnp.float32) + bq_ref[...]
        k = jnp.dot(k_ref[...], wk_ref[...],
                    preferred_element_type=jnp.float32) + bk_ref[...]
        v = jnp.dot(v_ref[...], wv_ref[...],
                    preferred_element_type=jnp.float32) + bv_ref[...]
        q = q * scaling

        # Additive mask: 0 for same-batch (query,key) pairs, -1e30 otherwise.
        # This lets all N batch elements share one (LN, SN) score matrix.
        mask = mask_ref[...]

        ctx_parts = []
        if need_weights:
            w_sum = jnp.zeros((LN, SN), jnp.float32)

        # Short unrolled head loop (H is small); scores/softmax/PV per head.
        for h in range(num_heads):
            sl = slice(h * head_dim, (h + 1) * head_dim)
            s = jnp.dot(q[:, sl], k[:, sl].T,
                        preferred_element_type=jnp.float32) + mask      # (LN, SN)
            m = jnp.max(s, axis=-1, keepdims=True)
            e = jnp.exp(s - m)
            p = e / jnp.sum(e, axis=-1, keepdims=True)                  # softmax
            if need_weights:
                w_sum = w_sum + p
            ctx_parts.append(jnp.dot(p, v[:, sl],
                                     preferred_element_type=jnp.float32))  # (LN, hd)

        # Concatenated heads -> single output projection matmul.
        ctx = jnp.concatenate(ctx_parts, axis=-1)                       # (LN, E)
        out = jnp.dot(ctx, wo_ref[...],
                      preferred_element_type=jnp.float32) + bo_ref[...]
        out_ref[...] = out

        if need_weights:
            w_avg = w_sum * (1.0 / num_heads)                           # (LN, SN)
            # Extract per-batch (L, S) blocks: wts[n, l, s] = w_avg[l*N+n, s*N+n].
            # Done with one-hot selection matmuls (cheap MXU ops) to avoid strided
            # slicing / reshapes inside the kernel.
            lrow = jax.lax.broadcasted_iota(jnp.int32, (tgt_len, LN), 0)
            rcol = jax.lax.broadcasted_iota(jnp.int32, (tgt_len, LN), 1)
            crow = jax.lax.broadcasted_iota(jnp.int32, (SN, src_len), 0)
            scol = jax.lax.broadcasted_iota(jnp.int32, (SN, src_len), 1)
            for n in range(n_batch):
                row_sel = (rcol == lrow * n_batch + n).astype(jnp.float32)  # (L, LN)
                col_sel = (crow == scol * n_batch + n).astype(jnp.float32)  # (SN, S)
                w_rows = jnp.dot(row_sel, w_avg,
                                 preferred_element_type=jnp.float32)        # (L, SN)
                wts_ref[n] = jnp.dot(w_rows, col_sel,
                                     preferred_element_type=jnp.float32)    # (L, S)

    return kernel


def multihead_attention_pallas(query, key, value, params, num_heads,
                               need_weights=True):
    """query: (L, N, E); key, value: (S, N, E).

    Returns (attn_output (L,N,E), avg_attn_weights (N,L,S) or None)."""
    L, N, E = query.shape
    S = key.shape[0]
    head_dim = E // num_heads
    assert head_dim * num_heads == E

    in_w = params["in_proj_weight"]   # (3E, E)
    in_b = params["in_proj_bias"]     # (3E,)
    wo = params["out_proj_weight"]    # (E, E)
    bo = params["out_proj_bias"]      # (E,)

    # Pre-transpose weights so the kernel does plain x @ W.
    wq_t = in_w[:E].T
    wk_t = in_w[E:2 * E].T
    wv_t = in_w[2 * E:].T
    bq = in_b[:E].reshape(1, E)
    bk = in_b[E:2 * E].reshape(1, E)
    bv = in_b[2 * E:].reshape(1, E)
    wo_t = wo.T
    bo2 = bo.reshape(1, E)

    LN, SN = L * N, S * N
    # Contiguous flatten of the seq-major tensors (no HBM transpose / data movement).
    q2 = query.reshape(LN, E)
    k2 = key.reshape(SN, E)
    v2 = value.reshape(SN, E)

    # Block-diagonal batch mask (additive): keep only same-batch (query, key) pairs.
    qn = jnp.arange(LN) % N
    kn = jnp.arange(SN) % N
    mask = jnp.where(qn[:, None] == kn[None, :], 0.0, -1e30).astype(jnp.float32)

    kernel = _make_mha_kernel(num_heads=num_heads, head_dim=head_dim, n_batch=N,
                              tgt_len=L, src_len=S, need_weights=need_weights)

    def full_spec(shape):
        return pl.BlockSpec(shape, lambda *_: (0,) * len(shape))

    out_shapes = [jax.ShapeDtypeStruct((LN, E), jnp.float32)]
    out_specs = [full_spec((LN, E))]
    if need_weights:
        out_shapes.append(jax.ShapeDtypeStruct((N, L, S), jnp.float32))
        out_specs.append(full_spec((N, L, S)))

    # Single grid step: problem fits easily in VMEM; avoids per-step overhead.
    # (On v7x one could split rows across the two TensorCores, but at this size the
    # split overhead exceeds the work.)
    results = pl.pallas_call(
        kernel,
        out_shape=tuple(out_shapes),
        grid=(1,),
        in_specs=[
            full_spec((LN, E)), full_spec((SN, E)), full_spec((SN, E)),
            full_spec((E, E)), full_spec((E, E)), full_spec((E, E)),
            full_spec((1, E)), full_spec((1, E)), full_spec((1, E)),
            full_spec((E, E)), full_spec((1, E)),
            full_spec((LN, SN)),
        ],
        out_specs=tuple(out_specs),
        compiler_params=pltpu.CompilerParams(dimension_semantics=("arbitrary",)),
    )(q2, k2, v2, wq_t, wk_t, wv_t, bq, bk, bv, wo_t, bo2, mask)

    if not isinstance(results, (tuple, list)):
        results = (results,)
    attn_output = results[0].reshape(L, N, E)   # free (row order is already (l, n))
    if need_weights:
        return attn_output, results[1]
    return attn_output, None


def multihead_attention_ref(query, key, value, params, num_heads):
    """Pure-JAX reference mirroring torch.nn.functional.multi_head_attention_forward."""
    L, N, E = query.shape
    hd = E // num_heads
    in_w = params["in_proj_weight"]
    in_b = params["in_proj_bias"]

    q = query @ in_w[:E].T + in_b[:E]
    k = key @ in_w[E:2 * E].T + in_b[E:2 * E]
    v = value @ in_w[2 * E:].T + in_b[2 * E:]
    q = q * (float(hd) ** -0.5)

    q = q.reshape(L, N * num_heads, hd).transpose(1, 0, 2)
    k = k.reshape(-1, N * num_heads, hd).transpose(1, 0, 2)
    v = v.reshape(-1, N * num_heads, hd).transpose(1, 0, 2)

    w = jnp.einsum('bld,bsd->bls', q, k)
    w = jax.nn.softmax(w, axis=-1)
    o = jnp.einsum('bls,bsd->bld', w, v)
    o = o.transpose(1, 0, 2).reshape(L, N, E)
    o = o @ params["out_proj_weight"].T + params["out_proj_bias"]
    w_avg = w.reshape(N, num_heads, L, -1).sum(axis=1) / num_heads
    return o, w_avg


def init_params(key, embed_dim):
    """Deterministic parameter init mimicking MultiheadAttention._reset_parameters."""
    k1, k2 = jax.random.split(key)
    # xavier_uniform_ on in_proj_weight (3E, E)
    bound_in = (6.0 / (3 * embed_dim + embed_dim)) ** 0.5
    in_proj_weight = jax.random.uniform(
        k1, (3 * embed_dim, embed_dim), jnp.float32, -bound_in, bound_in)
    in_proj_bias = jnp.zeros((3 * embed_dim,), jnp.float32)
    bound_out = (1.0 / embed_dim) ** 0.5
    out_proj_weight = jax.random.uniform(
        k2, (embed_dim, embed_dim), jnp.float32, -bound_out, bound_out)
    out_proj_bias = jnp.zeros((embed_dim,), jnp.float32)
    return {
        "in_proj_weight": in_proj_weight,
        "in_proj_bias": in_proj_bias,
        "out_proj_weight": out_proj_weight,
        "out_proj_bias": out_proj_bias,
    }


if __name__ == "__main__":
    L, S, N, E, H = 8, 8, 2, 32, 4

    root = jax.random.PRNGKey(0)
    kp, kq, kk, kv = jax.random.split(root, 4)
    params = init_params(kp, E)

    query = jax.random.normal(kq, (L, N, E), jnp.float32)
    key = jax.random.normal(kk, (S, N, E), jnp.float32)
    value = jax.random.normal(kv, (S, N, E), jnp.float32)

    attn_out, attn_wts = multihead_attention_pallas(query, key, value, params, H)
    attn_out = jax.block_until_ready(attn_out)
    attn_wts = jax.block_until_ready(attn_wts)

    ref_out, ref_wts = multihead_attention_ref(query, key, value, params, H)

    assert attn_out.shape == (L, N, E)
    assert attn_wts.shape == (N, L, S)
    assert jnp.allclose(attn_out, ref_out, atol=1e-4, rtol=1e-4)
    assert jnp.allclose(attn_wts, ref_wts, atol=1e-4, rtol=1e-4)

    # need_weights=False fast path (no weights output / accumulator / writeback).
    out_nw, wts_nw = multihead_attention_pallas(query, key, value, params, H,
                                                need_weights=False)
    out_nw = jax.block_until_ready(out_nw)
    assert wts_nw is None
    assert jnp.allclose(out_nw, ref_out, atol=1e-4, rtol=1e-4)

    print("KERNEL_OK")
</pallas_src>

<mosaic_0001>
module attributes {stable_mosaic.version = 11 : i64} {
  func.func @kernel(%arg0: i32, %arg1: memref<16x32xf32, #tpu.memory_space<vmem>>, %arg2: memref<16x32xf32, #tpu.memory_space<vmem>>, %arg3: memref<16x32xf32, #tpu.memory_space<vmem>>, %arg4: memref<32x32xf32, #tpu.memory_space<vmem>>, %arg5: memref<32x32xf32, #tpu.memory_space<vmem>>, %arg6: memref<32x32xf32, #tpu.memory_space<vmem>>, %arg7: memref<1x32xf32, #tpu.memory_space<vmem>>, %arg8: memref<1x32xf32, #tpu.memory_space<vmem>>, %arg9: memref<1x32xf32, #tpu.memory_space<vmem>>, %arg10: memref<32x32xf32, #tpu.memory_space<vmem>>, %arg11: memref<1x32xf32, #tpu.memory_space<vmem>>, %arg12: memref<16x16xf32, #tpu.memory_space<vmem>>, %arg13: memref<16x32xf32, #tpu.memory_space<vmem>>, %arg14: memref<2x8x8xf32, #tpu.memory_space<vmem>>) attributes {dimension_semantics = [#tpu.dimension_semantics<arbitrary>], iteration_bounds = array<i64: 1>, scalar_prefetch = 0 : i64, scratch_operands = 0 : i64, tpu.core_type = #tpu.core_type<tc>, window_params = [{pipeline_mode = #tpu.pipeline_mode<synchronous>, transform_indices = @transform_0, window_bounds = array<i64: 16, 32>}, {pipeline_mode = #tpu.pipeline_mode<synchronous>, transform_indices = @transform_1, window_bounds = array<i64: 16, 32>}, {pipeline_mode = #tpu.pipeline_mode<synchronous>, transform_indices = @transform_2, window_bounds = array<i64: 16, 32>}, {pipeline_mode = #tpu.pipeline_mode<synchronous>, transform_indices = @transform_3, window_bounds = array<i64: 32, 32>}, {pipeline_mode = #tpu.pipeline_mode<synchronous>, transform_indices = @transform_4, window_bounds = array<i64: 32, 32>}, {pipeline_mode = #tpu.pipeline_mode<synchronous>, transform_indices = @transform_5, window_bounds = array<i64: 32, 32>}, {pipeline_mode = #tpu.pipeline_mode<synchronous>, transform_indices = @transform_6, window_bounds = array<i64: 1, 32>}, {pipeline_mode = #tpu.pipeline_mode<synchronous>, transform_indices = @transform_7, window_bounds = array<i64: 1, 32>}, {pipeline_mode = #tpu.pipeline_mode<synchronous>, transform_indices = @transform_8, window_bounds = array<i64: 1, 32>}, {pipeline_mode = #tpu.pipeline_mode<synchronous>, transform_indices = @transform_9, window_bounds = array<i64: 32, 32>}, {pipeline_mode = #tpu.pipeline_mode<synchronous>, transform_indices = @transform_10, window_bounds = array<i64: 1, 32>}, {pipeline_mode = #tpu.pipeline_mode<synchronous>, transform_indices = @transform_11, window_bounds = array<i64: 16, 16>}, {pipeline_mode = #tpu.pipeline_mode<synchronous>, transform_indices = @transform_12, window_bounds = array<i64: 16, 32>}, {pipeline_mode = #tpu.pipeline_mode<synchronous>, transform_indices = @transform_13, window_bounds = array<i64: 2, 8, 8>}]} {
    %c0 = arith.constant 0 : index
    %c0_0 = arith.constant 0 : index
    %0 = vector.load %arg1[%c0, %c0_0] : memref<16x32xf32, #tpu.memory_space<vmem>>, vector<16x32xf32>
    %c0_1 = arith.constant 0 : index
    %c0_2 = arith.constant 0 : index
    %1 = vector.load %arg4[%c0_1, %c0_2] : memref<32x32xf32, #tpu.memory_space<vmem>>, vector<32x32xf32>
    %cst = arith.constant dense<0.000000e+00> : vector<16x32xf32>
    %2 = tpu.matmul %0, %1, %cst {dimension_numbers = #tpu.dot_dimension_numbers<[1], [0], [0], [1], [0, 0, 1, 1], [], []>} : vector<16x32xf32>, vector<32x32xf32>, vector<16x32xf32> -> vector<16x32xf32>
    %c0_3 = arith.constant 0 : index
    %c0_4 = arith.constant 0 : index
    %3 = vector.load %arg7[%c0_3, %c0_4] : memref<1x32xf32, #tpu.memory_space<vmem>>, vector<1x32xf32>
    %4 = vector.broadcast %3 : vector<1x32xf32> to vector<16x32xf32>
    %5 = arith.addf %2, %4 : vector<16x32xf32>
    %c0_5 = arith.constant 0 : index
    %c0_6 = arith.constant 0 : index
    %6 = vector.load %arg2[%c0_5, %c0_6] : memref<16x32xf32, #tpu.memory_space<vmem>>, vector<16x32xf32>
    %c0_7 = arith.constant 0 : index
    %c0_8 = arith.constant 0 : index
    %7 = vector.load %arg5[%c0_7, %c0_8] : memref<32x32xf32, #tpu.memory_space<vmem>>, vector<32x32xf32>
    %cst_9 = arith.constant dense<0.000000e+00> : vector<16x32xf32>
    %8 = tpu.matmul %6, %7, %cst_9 {dimension_numbers = #tpu.dot_dimension_numbers<[1], [0], [0], [1], [0, 0, 1, 1], [], []>} : vector<16x32xf32>, vector<32x32xf32>, vector<16x32xf32> -> vector<16x32xf32>
    %c0_10 = arith.constant 0 : index
    %c0_11 = arith.constant 0 : index
    %9 = vector.load %arg8[%c0_10, %c0_11] : memref<1x32xf32, #tpu.memory_space<vmem>>, vector<1x32xf32>
    %10 = vector.broadcast %9 : vector<1x32xf32> to vector<16x32xf32>
    %11 = arith.addf %8, %10 : vector<16x32xf32>
    %c0_12 = arith.constant 0 : index
    %c0_13 = arith.constant 0 : index
    %12 = vector.load %arg3[%c0_12, %c0_13] : memref<16x32xf32, #tpu.memory_space<vmem>>, vector<16x32xf32>
    %c0_14 = arith.constant 0 : index
    %c0_15 = arith.constant 0 : index
    %13 = vector.load %arg6[%c0_14, %c0_15] : memref<32x32xf32, #tpu.memory_space<vmem>>, vector<32x32xf32>
    %cst_16 = arith.constant dense<0.000000e+00> : vector<16x32xf32>
    %14 = tpu.matmul %12, %13, %cst_16 {dimension_numbers = #tpu.dot_dimension_numbers<[1], [0], [0], [1], [0, 0, 1, 1], [], []>} : vector<16x32xf32>, vector<32x32xf32>, vector<16x32xf32> -> vector<16x32xf32>
    %c0_17 = arith.constant 0 : index
    %c0_18 = arith.constant 0 : index
    %15 = vector.load %arg9[%c0_17, %c0_18] : memref<1x32xf32, #tpu.memory_space<vmem>>, vector<1x32xf32>
    %16 = vector.broadcast %15 : vector<1x32xf32> to vector<16x32xf32>
    %17 = arith.addf %14, %16 : vector<16x32xf32>
    %cst_19 = arith.constant 0.353553385 : f32
    %18 = vector.broadcast %cst_19 : f32 to vector<16x32xf32>
    %19 = arith.mulf %5, %18 : vector<16x32xf32>
    %c0_20 = arith.constant 0 : index
    %c0_21 = arith.constant 0 : index
    %20 = vector.load %arg12[%c0_20, %c0_21] : memref<16x16xf32, #tpu.memory_space<vmem>>, vector<16x16xf32>
    %cst_22 = arith.constant 0.000000e+00 : f32
    %21 = vector.broadcast %cst_22 : f32 to vector<16x16xf32>
    %22 = vector.extract_strided_slice %19 {offsets = [0, 0], sizes = [16, 8], strides = [1, 1]} : vector<16x32xf32> to vector<16x8xf32>
    %23 = vector.extract_strided_slice %11 {offsets = [0, 0], sizes = [16, 8], strides = [1, 1]} : vector<16x32xf32> to vector<16x8xf32>
    %24 = tpu.transpose %23, [1, 0] : vector<16x8xf32> -> vector<8x16xf32>
    %cst_23 = arith.constant dense<0.000000e+00> : vector<16x16xf32>
    %25 = tpu.matmul %22, %24, %cst_23 {dimension_numbers = #tpu.dot_dimension_numbers<[1], [0], [0], [1], [0, 0, 1, 1], [], []>} : vector<16x8xf32>, vector<8x16xf32>, vector<16x16xf32> -> vector<16x16xf32>
    %26 = arith.addf %25, %20 : vector<16x16xf32>
    %cst_24 = arith.constant dense<0xFF800000> : vector<16xf32>
    %27 = vector.multi_reduction <maximumf>, %26, %cst_24 [1] : vector<16x16xf32> to vector<16xf32>
    %28 = vector.shape_cast %27 : vector<16xf32> to vector<16x1xf32>
    %29 = vector.broadcast %28 : vector<16x1xf32> to vector<16x16xf32>
    %30 = arith.subf %26, %29 : vector<16x16xf32>
    %31 = math.exp %30 : vector<16x16xf32>
    %cst_25 = arith.constant dense<0.000000e+00> : vector<16xf32>
    %32 = vector.multi_reduction <add>, %31, %cst_25 [1] : vector<16x16xf32> to vector<16xf32>
    %33 = vector.shape_cast %32 : vector<16xf32> to vector<16x1xf32>
    %34 = vector.broadcast %33 : vector<16x1xf32> to vector<16x16xf32>
    %35 = arith.divf %31, %34 : vector<16x16xf32>
    %36 = arith.addf %21, %35 : vector<16x16xf32>
    %37 = vector.extract_strided_slice %17 {offsets = [0, 0], sizes = [16, 8], strides = [1, 1]} : vector<16x32xf32> to vector<16x8xf32>
    %cst_26 = arith.constant dense<0.000000e+00> : vector<16x8xf32>
    %38 = tpu.matmul %35, %37, %cst_26 {dimension_numbers = #tpu.dot_dimension_numbers<[1], [0], [0], [1], [0, 0, 1, 1], [], []>} : vector<16x16xf32>, vector<16x8xf32>, vector<16x8xf32> -> vector<16x8xf32>
    %39 = vector.extract_strided_slice %19 {offsets = [0, 8], sizes = [16, 8], strides = [1, 1]} : vector<16x32xf32> to vector<16x8xf32>
    %40 = vector.extract_strided_slice %11 {offsets = [0, 8], sizes = [16, 8], strides = [1, 1]} : vector<16x32xf32> to vector<16x8xf32>
    %41 = tpu.transpose %40, [1, 0] : vector<16x8xf32> -> vector<8x16xf32>
    %cst_27 = arith.constant dense<0.000000e+00> : vector<16x16xf32>
    %42 = tpu.matmul %39, %41, %cst_27 {dimension_numbers = #tpu.dot_dimension_numbers<[1], [0], [0], [1], [0, 0, 1, 1], [], []>} : vector<16x8xf32>, vector<8x16xf32>, vector<16x16xf32> -> vector<16x16xf32>
    %43 = arith.addf %42, %20 : vector<16x16xf32>
    %cst_28 = arith.constant dense<0xFF800000> : vector<16xf32>
    %44 = vector.multi_reduction <maximumf>, %43, %cst_28 [1] : vector<16x16xf32> to vector<16xf32>
    %45 = vector.shape_cast %44 : vector<16xf32> to vector<16x1xf32>
    %46 = vector.broadcast %45 : vector<16x1xf32> to vector<16x16xf32>
    %47 = arith.subf %43, %46 : vector<16x16xf32>
    %48 = math.exp %47 : vector<16x16xf32>
    %cst_29 = arith.constant dense<0.000000e+00> : vector<16xf32>
    %49 = vector.multi_reduction <add>, %48, %cst_29 [1] : vector<16x16xf32> to vector<16xf32>
    %50 = vector.shape_cast %49 : vector<16xf32> to vector<16x1xf32>
    %51 = vector.broadcast %50 : vector<16x1xf32> to vector<16x16xf32>
    %52 = arith.divf %48, %51 : vector<16x16xf32>
    %53 = arith.addf %36, %52 : vector<16x16xf32>
    %54 = vector.extract_strided_slice %17 {offsets = [0, 8], sizes = [16, 8], strides = [1, 1]} : vector<16x32xf32> to vector<16x8xf32>
    %cst_30 = arith.constant dense<0.000000e+00> : vector<16x8xf32>
    %55 = tpu.matmul %52, %54, %cst_30 {dimension_numbers = #tpu.dot_dimension_numbers<[1], [0], [0], [1], [0, 0, 1, 1], [], []>} : vector<16x16xf32>, vector<16x8xf32>, vector<16x8xf32> -> vector<16x8xf32>
    %56 = vector.extract_strided_slice %19 {offsets = [0, 16], sizes = [16, 8], strides = [1, 1]} : vector<16x32xf32> to vector<16x8xf32>
    %57 = vector.extract_strided_slice %11 {offsets = [0, 16], sizes = [16, 8], strides = [1, 1]} : vector<16x32xf32> to vector<16x8xf32>
    %58 = tpu.transpose %57, [1, 0] : vector<16x8xf32> -> vector<8x16xf32>
    %cst_31 = arith.constant dense<0.000000e+00> : vector<16x16xf32>
    %59 = tpu.matmul %56, %58, %cst_31 {dimension_numbers = #tpu.dot_dimension_numbers<[1], [0], [0], [1], [0, 0, 1, 1], [], []>} : vector<16x8xf32>, vector<8x16xf32>, vector<16x16xf32> -> vector<16x16xf32>
    %60 = arith.addf %59, %20 : vector<16x16xf32>
    %cst_32 = arith.constant dense<0xFF800000> : vector<16xf32>
    %61 = vector.multi_reduction <maximumf>, %60, %cst_32 [1] : vector<16x16xf32> to vector<16xf32>
    %62 = vector.shape_cast %61 : vector<16xf32> to vector<16x1xf32>
    %63 = vector.broadcast %62 : vector<16x1xf32> to vector<16x16xf32>
    %64 = arith.subf %60, %63 : vector<16x16xf32>
    %65 = math.exp %64 : vector<16x16xf32>
    %cst_33 = arith.constant dense<0.000000e+00> : vector<16xf32>
    %66 = vector.multi_reduction <add>, %65, %cst_33 [1] : vector<16x16xf32> to vector<16xf32>
    %67 = vector.shape_cast %66 : vector<16xf32> to vector<16x1xf32>
    %68 = vector.broadcast %67 : vector<16x1xf32> to vector<16x16xf32>
    %69 = arith.divf %65, %68 : vector<16x16xf32>
    %70 = arith.addf %53, %69 : vector<16x16xf32>
    %71 = vector.extract_strided_slice %17 {offsets = [0, 16], sizes = [16, 8], strides = [1, 1]} : vector<16x32xf32> to vector<16x8xf32>
    %cst_34 = arith.constant dense<0.000000e+00> : vector<16x8xf32>
    %72 = tpu.matmul %69, %71, %cst_34 {dimension_numbers = #tpu.dot_dimension_numbers<[1], [0], [0], [1], [0, 0, 1, 1], [], []>} : vector<16x16xf32>, vector<16x8xf32>, vector<16x8xf32> -> vector<16x8xf32>
    %73 = vector.extract_strided_slice %19 {offsets = [0, 24], sizes = [16, 8], strides = [1, 1]} : vector<16x32xf32> to vector<16x8xf32>
    %74 = vector.extract_strided_slice %11 {offsets = [0, 24], sizes = [16, 8], strides = [1, 1]} : vector<16x32xf32> to vector<16x8xf32>
    %75 = tpu.transpose %74, [1, 0] : vector<16x8xf32> -> vector<8x16xf32>
    %cst_35 = arith.constant dense<0.000000e+00> : vector<16x16xf32>
    %76 = tpu.matmul %73, %75, %cst_35 {dimension_numbers = #tpu.dot_dimension_numbers<[1], [0], [0], [1], [0, 0, 1, 1], [], []>} : vector<16x8xf32>, vector<8x16xf32>, vector<16x16xf32> -> vector<16x16xf32>
    %77 = arith.addf %76, %20 : vector<16x16xf32>
    %cst_36 = arith.constant dense<0xFF800000> : vector<16xf32>
    %78 = vector.multi_reduction <maximumf>, %77, %cst_36 [1] : vector<16x16xf32> to vector<16xf32>
    %79 = vector.shape_cast %78 : vector<16xf32> to vector<16x1xf32>
    %80 = vector.broadcast %79 : vector<16x1xf32> to vector<16x16xf32>
    %81 = arith.subf %77, %80 : vector<16x16xf32>
    %82 = math.exp %81 : vector<16x16xf32>
    %cst_37 = arith.constant dense<0.000000e+00> : vector<16xf32>
    %83 = vector.multi_reduction <add>, %82, %cst_37 [1] : vector<16x16xf32> to vector<16xf32>
    %84 = vector.shape_cast %83 : vector<16xf32> to vector<16x1xf32>
    %85 = vector.broadcast %84 : vector<16x1xf32> to vector<16x16xf32>
    %86 = arith.divf %82, %85 : vector<16x16xf32>
    %87 = arith.addf %70, %86 : vector<16x16xf32>
    %88 = vector.extract_strided_slice %17 {offsets = [0, 24], sizes = [16, 8], strides = [1, 1]} : vector<16x32xf32> to vector<16x8xf32>
    %cst_38 = arith.constant dense<0.000000e+00> : vector<16x8xf32>
    %89 = tpu.matmul %86, %88, %cst_38 {dimension_numbers = #tpu.dot_dimension_numbers<[1], [0], [0], [1], [0, 0, 1, 1], [], []>} : vector<16x16xf32>, vector<16x8xf32>, vector<16x8xf32> -> vector<16x8xf32>
    %90 = tpu.concatenate %38, %55, %72, %89 in 1 : vector<16x8xf32>, vector<16x8xf32>, vector<16x8xf32>, vector<16x8xf32> -> vector<16x32xf32>
    %c0_39 = arith.constant 0 : index
    %c0_40 = arith.constant 0 : index
    %91 = vector.load %arg10[%c0_39, %c0_40] : memref<32x32xf32, #tpu.memory_space<vmem>>, vector<32x32xf32>
    %cst_41 = arith.constant dense<0.000000e+00> : vector<16x32xf32>
    %92 = tpu.matmul %90, %91, %cst_41 {dimension_numbers = #tpu.dot_dimension_numbers<[1], [0], [0], [1], [0, 0, 1, 1], [], []>} : vector<16x32xf32>, vector<32x32xf32>, vector<16x32xf32> -> vector<16x32xf32>
    %c0_42 = arith.constant 0 : index
    %c0_43 = arith.constant 0 : index
    %93 = vector.load %arg11[%c0_42, %c0_43] : memref<1x32xf32, #tpu.memory_space<vmem>>, vector<1x32xf32>
    %94 = vector.broadcast %93 : vector<1x32xf32> to vector<16x32xf32>
    %95 = arith.addf %92, %94 : vector<16x32xf32>
    %c0_44 = arith.constant 0 : index
    %c0_45 = arith.constant 0 : index
    %96 = vector.load %arg13[%c0_44, %c0_45] : memref<16x32xf32, #tpu.memory_space<vmem>>, vector<16x32xf32>
    tpu.vector_store %arg13[%c0_44, %c0_45], %95 {strides = array<i32>} : memref<16x32xf32, #tpu.memory_space<vmem>>, vector<16x32xf32>,
    %cst_46 = arith.constant 2.500000e-01 : f32
    %97 = vector.broadcast %cst_46 : f32 to vector<16x16xf32>
    %98 = arith.mulf %87, %97 : vector<16x16xf32>
    %99 = tpu.iota {dimensions = array<i32: 0>} : vector<8x16xi32>
    %100 = tpu.iota {dimensions = array<i32: 1>} : vector<8x16xi32>
    %101 = tpu.iota {dimensions = array<i32: 0>} : vector<16x8xi32>
    %102 = tpu.iota {dimensions = array<i32: 1>} : vector<16x8xi32>
    %c2_i32 = arith.constant 2 : i32
    %103 = vector.broadcast %c2_i32 : i32 to vector<8x16xi32>
    %104 = arith.muli %99, %103 : vector<8x16xi32>
    %c0_i32 = arith.constant 0 : i32
    %105 = vector.broadcast %c0_i32 : i32 to vector<8x16xi32>
    %106 = arith.addi %104, %105 : vector<8x16xi32>
    %107 = arith.cmpi eq, %100, %106 : vector<8x16xi32>
    %108 = arith.extui %107 : vector<8x16xi1> to vector<8x16xi32>
    %109 = arith.sitofp %108 : vector<8x16xi32> to vector<8x16xf32>
    %c2_i32_47 = arith.constant 2 : i32
    %110 = vector.broadcast %c2_i32_47 : i32 to vector<16x8xi32>
    %111 = arith.muli %102, %110 : vector<16x8xi32>
    %c0_i32_48 = arith.constant 0 : i32
    %112 = vector.broadcast %c0_i32_48 : i32 to vector<16x8xi32>
    %113 = arith.addi %111, %112 : vector<16x8xi32>
    %114 = arith.cmpi eq, %101, %113 : vector<16x8xi32>
    %115 = arith.extui %114 : vector<16x8xi1> to vector<16x8xi32>
    %116 = arith.sitofp %115 : vector<16x8xi32> to vector<16x8xf32>
    %cst_49 = arith.constant dense<0.000000e+00> : vector<8x16xf32>
    %117 = tpu.matmul %109, %98, %cst_49 {dimension_numbers = #tpu.dot_dimension_numbers<[1], [0], [0], [1], [0, 0, 1, 1], [], []>} : vector<8x16xf32>, vector<16x16xf32>, vector<8x16xf32> -> vector<8x16xf32>
    %cst_50 = arith.constant dense<0.000000e+00> : vector<8x8xf32>
    %118 = tpu.matmul %117, %116, %cst_50 {dimension_numbers = #tpu.dot_dimension_numbers<[1], [0], [0], [1], [0, 0, 1, 1], [], []>} : vector<8x16xf32>, vector<16x8xf32>, vector<8x8xf32> -> vector<8x8xf32>
    %c0_51 = arith.constant 0 : index
    %c0_52 = arith.constant 0 : index
    %c0_53 = arith.constant 0 : index
    %119 = vector.load %arg14[%c0_51, %c0_52, %c0_53] : memref<2x8x8xf32, #tpu.memory_space<vmem>>, vector<1x8x8xf32>
    %120 = vector.shape_cast %119 : vector<1x8x8xf32> to vector<8x8xf32>
    %121 = vector.shape_cast %118 : vector<8x8xf32> to vector<1x8x8xf32>
    tpu.vector_store %arg14[%c0_51, %c0_52, %c0_53], %121 {strides = array<i32>} : memref<2x8x8xf32, #tpu.memory_space<vmem>>, vector<1x8x8xf32>,
    %c2_i32_54 = arith.constant 2 : i32
    %122 = vector.broadcast %c2_i32_54 : i32 to vector<8x16xi32>
    %123 = arith.muli %99, %122 : vector<8x16xi32>
    %c1_i32 = arith.constant 1 : i32
    %124 = vector.broadcast %c1_i32 : i32 to vector<8x16xi32>
    %125 = arith.addi %123, %124 : vector<8x16xi32>
    %126 = arith.cmpi eq, %100, %125 : vector<8x16xi32>
    %127 = arith.extui %126 : vector<8x16xi1> to vector<8x16xi32>
    %128 = arith.sitofp %127 : vector<8x16xi32> to vector<8x16xf32>
    %c2_i32_55 = arith.constant 2 : i32
    %129 = vector.broadcast %c2_i32_55 : i32 to vector<16x8xi32>
    %130 = arith.muli %102, %129 : vector<16x8xi32>
    %c1_i32_56 = arith.constant 1 : i32
    %131 = vector.broadcast %c1_i32_56 : i32 to vector<16x8xi32>
    %132 = arith.addi %130, %131 : vector<16x8xi32>
    %133 = arith.cmpi eq, %101, %132 : vector<16x8xi32>
    %134 = arith.extui %133 : vector<16x8xi1> to vector<16x8xi32>
    %135 = arith.sitofp %134 : vector<16x8xi32> to vector<16x8xf32>
    %cst_57 = arith.constant dense<0.000000e+00> : vector<8x16xf32>
    %136 = tpu.matmul %128, %98, %cst_57 {dimension_numbers = #tpu.dot_dimension_numbers<[1], [0], [0], [1], [0, 0, 1, 1], [], []>} : vector<8x16xf32>, vector<16x16xf32>, vector<8x16xf32> -> vector<8x16xf32>
    %cst_58 = arith.constant dense<0.000000e+00> : vector<8x8xf32>
    %137 = tpu.matmul %136, %135, %cst_58 {dimension_numbers = #tpu.dot_dimension_numbers<[1], [0], [0], [1], [0, 0, 1, 1], [], []>} : vector<8x16xf32>, vector<16x8xf32>, vector<8x8xf32> -> vector<8x8xf32>
    %c1 = arith.constant 1 : index
    %c0_59 = arith.constant 0 : index
    %c0_60 = arith.constant 0 : index
    %138 = vector.load %arg14[%c1, %c0_59, %c0_60] : memref<2x8x8xf32, #tpu.memory_space<vmem>>, vector<1x8x8xf32>
    %139 = vector.shape_cast %138 : vector<1x8x8xf32> to vector<8x8xf32>
    %140 = vector.shape_cast %137 : vector<8x8xf32> to vector<1x8x8xf32>
    tpu.vector_store %arg14[%c1, %c0_59, %c0_60], %140 {strides = array<i32>} : memref<2x8x8xf32, #tpu.memory_space<vmem>>, vector<1x8x8xf32>,
    return
  }
  func.func @transform_0(%arg0: i32) -> (i32, i32) {
    %c0_i32 = arith.constant 0 : i32
    %c0_i32_0 = arith.constant 0 : i32
    %c0_i32_1 = arith.constant 0 : i32
    return %c0_i32, %c0_i32_0 : i32, i32
  }
  func.func @transform_1(%arg0: i32) -> (i32, i32) {
    %c0_i32 = arith.constant 0 : i32
    %c0_i32_0 = arith.constant 0 : i32
    %c0_i32_1 = arith.constant 0 : i32
    return %c0_i32, %c0_i32_0 : i32, i32
  }
  func.func @transform_2(%arg0: i32) -> (i32, i32) {
    %c0_i32 = arith.constant 0 : i32
    %c0_i32_0 = arith.constant 0 : i32
    %c0_i32_1 = arith.constant 0 : i32
    return %c0_i32, %c0_i32_0 : i32, i32
  }
  func.func @transform_3(%arg0: i32) -> (i32, i32) {
    %c0_i32 = arith.constant 0 : i32
    %c0_i32_0 = arith.constant 0 : i32
    %c0_i32_1 = arith.constant 0 : i32
    return %c0_i32, %c0_i32_0 : i32, i32
  }
  func.func @transform_4(%arg0: i32) -> (i32, i32) {
    %c0_i32 = arith.constant 0 : i32
    %c0_i32_0 = arith.constant 0 : i32
    %c0_i32_1 = arith.constant 0 : i32
    return %c0_i32, %c0_i32_0 : i32, i32
  }
  func.func @transform_5(%arg0: i32) -> (i32, i32) {
    %c0_i32 = arith.constant 0 : i32
    %c0_i32_0 = arith.constant 0 : i32
    %c0_i32_1 = arith.constant 0 : i32
    return %c0_i32, %c0_i32_0 : i32, i32
  }
  func.func @transform_6(%arg0: i32) -> (i32, i32) {
    %c0_i32 = arith.constant 0 : i32
    %c0_i32_0 = arith.constant 0 : i32
    %c0_i32_1 = arith.constant 0 : i32
    return %c0_i32, %c0_i32_0 : i32, i32
  }
  func.func @transform_7(%arg0: i32) -> (i32, i32) {
    %c0_i32 = arith.constant 0 : i32
    %c0_i32_0 = arith.constant 0 : i32
    %c0_i32_1 = arith.constant 0 : i32
    return %c0_i32, %c0_i32_0 : i32, i32
  }
  func.func @transform_8(%arg0: i32) -> (i32, i32) {
    %c0_i32 = arith.constant 0 : i32
    %c0_i32_0 = arith.constant 0 : i32
    %c0_i32_1 = arith.constant 0 : i32
    return %c0_i32, %c0_i32_0 : i32, i32
  }
  func.func @transform_9(%arg0: i32) -> (i32, i32) {
    %c0_i32 = arith.constant 0 : i32
    %c0_i32_0 = arith.constant 0 : i32
    %c0_i32_1 = arith.constant 0 : i32
    return %c0_i32, %c0_i32_0 : i32, i32
  }
  func.func @transform_10(%arg0: i32) -> (i32, i32) {
    %c0_i32 = arith.constant 0 : i32
    %c0_i32_0 = arith.constant 0 : i32
    %c0_i32_1 = arith.constant 0 : i32
    return %c0_i32, %c0_i32_0 : i32, i32
  }
  func.func @transform_11(%arg0: i32) -> (i32, i32) {
    %c0_i32 = arith.constant 0 : i32
    %c0_i32_0 = arith.constant 0 : i32
    %c0_i32_1 = arith.constant 0 : i32
    return %c0_i32, %c0_i32_0 : i32, i32
  }
  func.func @transform_12(%arg0: i32) -> (i32, i32) {
    %c0_i32 = arith.constant 0 : i32
    %c0_i32_0 = arith.constant 0 : i32
    %c0_i32_1 = arith.constant 0 : i32
    return %c0_i32, %c0_i32_0 : i32, i32
  }
  func.func @transform_13(%arg0: i32) -> (i32, i32, i32) {
    %c0_i32 = arith.constant 0 : i32
    %c0_i32_0 = arith.constant 0 : i32
    %c0_i32_1 = arith.constant 0 : i32
    %c0_i32_2 = arith.constant 0 : i32
    return %c0_i32, %c0_i32_0, %c0_i32_1 : i32, i32, i32
  }
}

</mosaic_0001>

<llo_original>
// kernel: tpu_custom_call.1
$region0: #{tpu_custom_call.1}
  #allocation0 [shape = 'u32[]', space=smem, size = 0x4, offset = 0x4, fixed_abs, tag = 'smem constant byte address 0x4 - core index']
  #allocation1 [shape = 'u32[144,128]{1,0:T(1,128)}', space=vmem, size = 0x12000, scoped, tag = 'internal scratch']
  %s0 = inlined_call_operand.hbm [shape: f32[16,32], index: 0, kind: input, shape index: {}]
  %s1 = inlined_call_operand.hbm [shape: f32[16,32], index: 1, kind: input, shape index: {}]
  %s2 = inlined_call_operand.hbm [shape: f32[16,32], index: 2, kind: input, shape index: {}]
  %s3 = inlined_call_operand.hbm [shape: f32[32,32], index: 3, kind: input, shape index: {}]
  %s4 = inlined_call_operand.hbm [shape: f32[32,32], index: 4, kind: input, shape index: {}]
  %s5 = inlined_call_operand.hbm [shape: f32[32,32], index: 5, kind: input, shape index: {}]
  %s6 = inlined_call_operand.vmem [shape: f32[1,32], index: 6, kind: input, shape index: {}]
  %s7 = inlined_call_operand.vmem [shape: f32[1,32], index: 7, kind: input, shape index: {}]
  %s8 = inlined_call_operand.vmem [shape: f32[1,32], index: 8, kind: input, shape index: {}]
  %s9 = inlined_call_operand.hbm [shape: f32[32,32], index: 9, kind: input, shape index: {}]
  %s10 = inlined_call_operand.vmem [shape: f32[1,32], index: 10, kind: input, shape index: {}]
  %s11 = inlined_call_operand.vmem [shape: f32[16,16], index: 11, kind: input, shape index: {}]
  %s12 = inlined_call_operand.hbm [shape: f32[16,32], index: 12, kind: output, shape index: {0}]
  %s13 = inlined_call_operand.hbm [shape: f32[2,8,8], index: 13, kind: output, shape index: {1}]
  %14 = xla_tuple %s12, %s13
  %s15 = sld [smem:[#allocation0]]
  $region94: #{tpu_custom_call.1} parent=0
    _
  %s17 = ssub.s32 1, %s15
  %s18 = scalar_select 0, %s17, %s15
  $region1: #{tpu_custom_call.1} parent=0
    #allocation2 [shape = 'u8[8192]{0}', space=vmem, size = 0x2000, scoped, tag = 'input window, operand 0, single buffered']
    #allocation3 [shape = 's32[1]{0}', space=sflag, size = 0x4, scoped, tag = 'scoped memory for tpu_custom_call.1']
    #allocation4 [shape = 's32[1]{0}', space=sflag, size = 0x4, scoped, tag = 'scoped memory for tpu_custom_call.1']
    #allocation5 [shape = 'u8[8192]{0}', space=vmem, size = 0x2000, scoped, tag = 'input window, operand 1, single buffered']
    #allocation6 [shape = 's32[1]{0}', space=sflag, size = 0x4, scoped, tag = 'scoped memory for tpu_custom_call.1']
    #allocation7 [shape = 'u8[8192]{0}', space=vmem, size = 0x2000, scoped, tag = 'input window, operand 2, single buffered']
    #allocation8 [shape = 'u8[16384]{0}', space=vmem, size = 0x4000, scoped, tag = 'input window, operand 3, single buffered']
    #allocation9 [shape = 's32[1]{0}', space=sflag, size = 0x4, scoped, tag = 'scoped memory for tpu_custom_call.1']
    #allocation10 [shape = 'u8[16384]{0}', space=vmem, size = 0x4000, scoped, tag = 'input window, operand 4, single buffered']
    #allocation11 [shape = 'u8[16384]{0}', space=vmem, size = 0x4000, scoped, tag = 'input window, operand 5, single buffered']
    #allocation12 [shape = 's32[1]{0}', space=sflag, size = 0x4, scoped, tag = 'scoped memory for tpu_custom_call.1']
    #allocation13 [shape = 'u8[16384]{0}', space=vmem, size = 0x4000, scoped, tag = 'input window, operand 9, single buffered']
    #allocation14 [shape = 'u8[8192]{0}', space=vmem, size = 0x2000, scoped, tag = 'output window, operand 0, single buffered']
    #allocation15 [shape = 'u8[8192]{0}', space=vmem, size = 0x2000, scoped, tag = 'output window, operand 1, single buffered']
    #allocation16 [shape = 's32[1]{0}', space=sflag, size = 0x4, scoped, tag = 'scoped memory for tpu_custom_call.1']
    %19 = vsyncpa [#allocation3], 0
    %20 = vsyncpa [#allocation6], 0
    %21 = vsyncpa [#allocation9], 0
    %22 = vsyncpa [#allocation12], 0
    %23 = vsyncpa [#allocation4], 0
    %24 = vsyncpa [#allocation16], 0
    // Predicated region
    $region2: #{tpu_custom_call.1} parent=1 // pred_check
      _
    $region3: #{tpu_custom_call.1} parent=1 // pred_check_branch
      %26 = sbr.rel (0) target = $region5
    $region4: #{tpu_custom_call.1} parent=1 // pred_region
      %s28 = ssub.s32 256, 256
      %29 = vsyncadd [#allocation3], %s28
      %s30 = sshll.u32 [#allocation2], 4
      %s31 = int_to_ptr.vmem [resolvable:$true] %s30
      %36 = dma.hbm_to_vmem [thread:$0]  %s0, 256, %s31, [#allocation3], 128, 128, 8
    $region5: #{tpu_custom_call.1} parent=1 // pred_fallthru
      _
    // Predicated region
    $region6: #{tpu_custom_call.1} parent=1 // pred_check
      _
    $region7: #{tpu_custom_call.1} parent=1 // pred_check_branch
      %38 = sbr.rel (0) target = $region9
    $region8: #{tpu_custom_call.1} parent=1 // pred_region
      %s40 = ssub.s32 256, 256
      %41 = vsyncadd [#allocation6], %s40
      %s42 = sshll.u32 [#allocation5], 4
      %s43 = int_to_ptr.vmem [resolvable:$true] %s42
      %48 = dma.hbm_to_vmem [thread:$0]  %s1, 256, %s43, [#allocation6], 128, 128, 8
    $region9: #{tpu_custom_call.1} parent=1 // pred_fallthru
      _
    // Predicated region
    $region10: #{tpu_custom_call.1} parent=1 // pred_check
      _
    $region11: #{tpu_custom_call.1} parent=1 // pred_check_branch
      %50 = sbr.rel (0) target = $region13
    $region12: #{tpu_custom_call.1} parent=1 // pred_region
      %s52 = ssub.s32 256, 256
      %53 = vsyncadd [#allocation6], %s52
      %s54 = sshll.u32 [#allocation7], 4
      %s55 = int_to_ptr.vmem [resolvable:$true] %s54
      %60 = dma.hbm_to_vmem [thread:$0]  %s2, 256, %s55, [#allocation6], 128, 128, 8
    $region13: #{tpu_custom_call.1} parent=1 // pred_fallthru
      _
    // Predicated region
    $region14: #{tpu_custom_call.1} parent=1 // pred_check
      _
    $region15: #{tpu_custom_call.1} parent=1 // pred_check_branch
      %62 = sbr.rel (0) target = $region17
    $region16: #{tpu_custom_call.1} parent=1 // pred_region
      %s64 = ssub.s32 512, 512
      %65 = vsyncadd [#allocation9], %s64
      %s66 = sshll.u32 [#allocation8], 4
      %s67 = int_to_ptr.vmem [resolvable:$true] %s66
      %72 = dma.hbm_to_vmem [thread:$0]  %s3, 512, %s67, [#allocation9], 128, 128, 8
    $region17: #{tpu_custom_call.1} parent=1 // pred_fallthru
      _
    // Predicated region
    $region18: #{tpu_custom_call.1} parent=1 // pred_check
      _
    $region19: #{tpu_custom_call.1} parent=1 // pred_check_branch
      %74 = sbr.rel (0) target = $region21
    $region20: #{tpu_custom_call.1} parent=1 // pred_region
      %s76 = ssub.s32 512, 512
      %77 = vsyncadd [#allocation9], %s76
      %s78 = sshll.u32 [#allocation10], 4
      %s79 = int_to_ptr.vmem [resolvable:$true] %s78
      %84 = dma.hbm_to_vmem [thread:$0]  %s4, 512, %s79, [#allocation9], 128, 128, 8
    $region21: #{tpu_custom_call.1} parent=1 // pred_fallthru
      _
    // Predicated region
    $region22: #{tpu_custom_call.1} parent=1 // pred_check
      _
    $region23: #{tpu_custom_call.1} parent=1 // pred_check_branch
      %86 = sbr.rel (0) target = $region25
    $region24: #{tpu_custom_call.1} parent=1 // pred_region
      %s88 = ssub.s32 512, 512
      %89 = vsyncadd [#allocation12], %s88
      %s90 = sshll.u32 [#allocation11], 4
      %s91 = int_to_ptr.vmem [resolvable:$true] %s90
      %96 = dma.hbm_to_vmem [thread:$0]  %s5, 512, %s91, [#allocation12], 128, 128, 8
    $region25: #{tpu_custom_call.1} parent=1 // pred_fallthru
      _
    // Predicated region
    $region26: #{tpu_custom_call.1} parent=1 // pred_check
      _
    $region27: #{tpu_custom_call.1} parent=1 // pred_check_branch
      %98 = sbr.rel (0) target = $region29
    $region28: #{tpu_custom_call.1} parent=1 // pred_region
      _
    $region29: #{tpu_custom_call.1} parent=1 // pred_fallthru
      _
    // Predicated region
    $region30: #{tpu_custom_call.1} parent=1 // pred_check
      _
    $region31: #{tpu_custom_call.1} parent=1 // pred_check_branch
      %100 = sbr.rel (0) target = $region33
    $region32: #{tpu_custom_call.1} parent=1 // pred_region
      _
    $region33: #{tpu_custom_call.1} parent=1 // pred_fallthru
      _
    // Predicated region
    $region34: #{tpu_custom_call.1} parent=1 // pred_check
      _
    $region35: #{tpu_custom_call.1} parent=1 // pred_check_branch
      %102 = sbr.rel (0) target = $region37
    $region36: #{tpu_custom_call.1} parent=1 // pred_region
      _
    $region37: #{tpu_custom_call.1} parent=1 // pred_fallthru
      _
    // Predicated region
    $region38: #{tpu_custom_call.1} parent=1 // pred_check
      _
    $region39: #{tpu_custom_call.1} parent=1 // pred_check_branch
      %104 = sbr.rel (0) target = $region41
    $region40: #{tpu_custom_call.1} parent=1 // pred_region
      %s106 = ssub.s32 512, 512
      %107 = vsyncadd [#allocation12], %s106
      %s108 = sshll.u32 [#allocation13], 4
      %s109 = int_to_ptr.vmem [resolvable:$true] %s108
      %114 = dma.hbm_to_vmem [thread:$0]  %s9, 512, %s109, [#allocation12], 128, 128, 8
    $region41: #{tpu_custom_call.1} parent=1 // pred_fallthru
      _
    // Predicated region
    $region42: #{tpu_custom_call.1} parent=1 // pred_check
      _
    $region43: #{tpu_custom_call.1} parent=1 // pred_check_branch
      %116 = sbr.rel (0) target = $region45
    $region44: #{tpu_custom_call.1} parent=1 // pred_region
      _
    $region45: #{tpu_custom_call.1} parent=1 // pred_fallthru
      _
    // Predicated region
    $region46: #{tpu_custom_call.1} parent=1 // pred_check
      _
    $region47: #{tpu_custom_call.1} parent=1 // pred_check_branch
      %118 = sbr.rel (0) target = $region49
    $region48: #{tpu_custom_call.1} parent=1 // pred_region
      _
    $region49: #{tpu_custom_call.1} parent=1 // pred_fallthru
      _
    // Predicated region
    $region50: #{tpu_custom_call.1} parent=1 // pred_check
      _
    $region51: #{tpu_custom_call.1} parent=1 // pred_check_branch
      %120 = sbr.rel (0) target = $region53
    $region52: #{tpu_custom_call.1} parent=1 // pred_region
      %121 = dma.done [#allocation3], 256
    $region53: #{tpu_custom_call.1} parent=1 // pred_fallthru
      _
    // Predicated region
    $region54: #{tpu_custom_call.1} parent=1 // pred_check
      _
    $region55: #{tpu_custom_call.1} parent=1 // pred_check_branch
      %123 = sbr.rel (0) target = $region57
    $region56: #{tpu_custom_call.1} parent=1 // pred_region
      %124 = dma.done [#allocation6], 256
    $region57: #{tpu_custom_call.1} parent=1 // pred_fallthru
      _
    // Predicated region
    $region58: #{tpu_custom_call.1} parent=1 // pred_check
      _
    $region59: #{tpu_custom_call.1} parent=1 // pred_check_branch
      %126 = sbr.rel (0) target = $region61
    $region60: #{tpu_custom_call.1} parent=1 // pred_region
      %127 = dma.done [#allocation6], 256
    $region61: #{tpu_custom_call.1} parent=1 // pred_fallthru
      _
    // Predicated region
    $region62: #{tpu_custom_call.1} parent=1 // pred_check
      _
    $region63: #{tpu_custom_call.1} parent=1 // pred_check_branch
      %129 = sbr.rel (0) target = $region65
    $region64: #{tpu_custom_call.1} parent=1 // pred_region
      %130 = dma.done [#allocation9], 512
    $region65: #{tpu_custom_call.1} parent=1 // pred_fallthru
      _
    // Predicated region
    $region66: #{tpu_custom_call.1} parent=1 // pred_check
      _
    $region67: #{tpu_custom_call.1} parent=1 // pred_check_branch
      %132 = sbr.rel (0) target = $region69
    $region68: #{tpu_custom_call.1} parent=1 // pred_region
      %133 = dma.done [#allocation9], 512
    $region69: #{tpu_custom_call.1} parent=1 // pred_fallthru
      _
    // Predicated region
    $region70: #{tpu_custom_call.1} parent=1 // pred_check
      _
    $region71: #{tpu_custom_call.1} parent=1 // pred_check_branch
      %135 = sbr.rel (0) target = $region73
    $region72: #{tpu_custom_call.1} parent=1 // pred_region
      %136 = dma.done [#allocation12], 512
    $region73: #{tpu_custom_call.1} parent=1 // pred_fallthru
      _
    // Predicated region
    $region74: #{tpu_custom_call.1} parent=1 // pred_check
      _
    $region75: #{tpu_custom_call.1} parent=1 // pred_check_branch
      %138 = sbr.rel (0) target = $region77
    $region76: #{tpu_custom_call.1} parent=1 // pred_region
      %139 = dma.done [#allocation12], 512
    $region77: #{tpu_custom_call.1} parent=1 // pred_fallthru
      _
    %v140 = vld [vmem:[#allocation2] sm:$0xff]
    %v141 = vld [vmem:[#allocation2 + $0x8] sm:$0xff]
    %v142 = vld [vmem:[#allocation8] sm:$0xff]
    %v143 = vld [vmem:[#allocation8 + $0x8] sm:$0xff]
    %v144 = vld [vmem:[#allocation8 + $0x10] sm:$0xff]
    %v145 = vld [vmem:[#allocation8 + $0x18] sm:$0xff]
    %v146 = vld [vmem:[%s6] sm:$0x1]
    %v148 = vlaneseq
    %v149 = vshrl.u32 %v148, 7
    %v150 = vsub.s32 0, %v149
    %v151 = vrot.slane %v146, %v150
    %vm153 = vcmask 261120
    %v155 = vsel %vm153, %v140, 0
    %v158 = vsel %vm153, %v141, 0
    %160 = vmatprep.subr.mxu0 0.0
    %161 = vmatpush1.msra.mxu0 0.0
    %162 = vmatprep.subr.mxu0 0.0
    %163 = vmatpush1.msra.mxu0 0.0
    %164 = vmatprep.subr.mxu0 0.0
    %165 = vmatpush1.msra.mxu0 0.0
    %166 = vmatprep.subr.mxu0 0.0
    %167 = vmatpush1.msra.mxu0 0.0
    %168 = vmatprep.subr.mxu0 0.0
    %169 = vmatpush1.msra.mxu0 0.0
    %170 = vmatprep.subr.mxu0 0.0
    %171 = vmatpush1.msra.mxu0 0.0
    %172 = vmatprep.subr.mxu0 0.0
    %173 = vmatpush1.msra.mxu0 0.0
    %174 = vmatprep.subr.mxu0 0.0
    %175 = vmatpush1.msra.mxu0 0.0
    %176 = vmatprep.subr.mxu0 0.0
    %177 = vmatpush1.msra.mxu0 0.0
    %178 = vmatprep.subr.mxu0 0.0
    %179 = vmatpush1.msra.mxu0 0.0
    %180 = vmatprep.subr.mxu0 0.0
    %181 = vmatpush1.msra.mxu0 0.0
    %182 = vmatprep.subr.mxu0 0.0
    %183 = vmatpush1.msra.mxu0 0.0
    %184 = vmatprep.subr.mxu0 0.0
    %185 = vmatpush1.msra.mxu0 %v145
    %186 = vmatprep.subr.mxu0 0.0
    %187 = vmatpush1.msra.mxu0 %v144
    %188 = vmatprep.subr.mxu0 0.0
    %189 = vmatpush1.msra.mxu0 %v143
    %190 = vmatprep.subr.mxu0 0.0
    %191 = vmatpush1.msra.mxu0 %v142
    %192 = vmatprep.subr.mxu0 0.0
    %193 = vmatpush2.msra.mxu0 0.0
    %194 = vmatprep.subr.mxu0 0.0
    %195 = vmatpush2.msra.mxu0 0.0
    %196 = vmatprep.subr.mxu0 0.0
    %197 = vmatpush2.msra.mxu0 0.0
    %198 = vmatprep.subr.mxu0 0.0
    %199 = vmatpush2.msra.mxu0 0.0
    %200 = vmatprep.subr.mxu0 0.0
    %201 = vmatpush2.msra.mxu0 0.0
    %202 = vmatprep.subr.mxu0 0.0
    %203 = vmatpush2.msra.mxu0 0.0
    %204 = vmatprep.subr.mxu0 0.0
    %205 = vmatpush2.msra.mxu0 0.0
    %206 = vmatprep.subr.mxu0 0.0
    %207 = vmatpush2.msra.mxu0 0.0
    %208 = vmatprep.subr.mxu0 0.0
    %209 = vmatpush2.msra.mxu0 0.0
    %210 = vmatprep.subr.mxu0 0.0
    %211 = vmatpush2.msra.mxu0 0.0
    %212 = vmatprep.subr.mxu0 0.0
    %213 = vmatpush2.msra.mxu0 0.0
    %214 = vmatprep.subr.mxu0 0.0
    %215 = vmatpush2.msra.mxu0 0.0
    %216 = vmatprep.subr.mxu0 0.0
    %217 = vmatpush2.msra.mxu0 0.0
    %218 = vmatprep.subr.mxu0 0.0
    %219 = vmatpush2.msra.mxu0 0.0
    %220 = vmatprep.subr.mxu0 0.0
    %221 = vmatpush2.msra.mxu0 0.0
    %222 = vmatprep.subr.mxu0 0.0
    %223 = vmatpush2.msra.mxu0 0.0
    %224 = vmatprep.mubr.f32.mxu0 0.0
    %225 = vmatmul.mubr.f32.gmra.mxu0 %v155
    %v226 = vpop.f32.mrf.mxu0
    %v227 = vadd.f32 %v151, %v226
    %v228 = vpop.f32.mrf.mxu0
    %229 = vmatprep.mubr.f32.mxu0 0.0
    %230 = vmatmul.mubr.f32.gmra.mxu0 %v158
    %v231 = vpop.f32.mrf.mxu0
    %v232 = vadd.f32 %v151, %v231
    %v233 = vpop.f32.mrf.mxu0
    %234 = vdwg.mxu0
    %v235 = vld [vmem:[#allocation5] sm:$0xff]
    %v236 = vld [vmem:[#allocation5 + $0x8] sm:$0xff]
    %v237 = vld [vmem:[#allocation10] sm:$0xff]
    %v238 = vld [vmem:[#allocation10 + $0x8] sm:$0xff]
    %v239 = vld [vmem:[#allocation10 + $0x10] sm:$0xff]
    %v240 = vld [vmem:[#allocation10 + $0x18] sm:$0xff]
    %v241 = vld [vmem:[%s7] sm:$0x1]
    %v243 = vlaneseq
    %v244 = vshrl.u32 %v243, 7
    %v245 = vsub.s32 0, %v244
    %v246 = vrot.slane %v241, %v245
    %v249 = vsel %vm153, %v235, 0
    %v252 = vsel %vm153, %v236, 0
    %254 = vmatprep.subr.mxu0 0.0
    %255 = vmatpush1.msra.mxu0 0.0
    %256 = vmatprep.subr.mxu0 0.0
    %257 = vmatpush1.msra.mxu0 0.0
    %258 = vmatprep.subr.mxu0 0.0
    %259 = vmatpush1.msra.mxu0 0.0
    %260 = vmatprep.subr.mxu0 0.0
    %261 = vmatpush1.msra.mxu0 0.0
    %262 = vmatprep.subr.mxu0 0.0
    %263 = vmatpush1.msra.mxu0 0.0
    %264 = vmatprep.subr.mxu0 0.0
    %265 = vmatpush1.msra.mxu0 0.0
    %266 = vmatprep.subr.mxu0 0.0
    %267 = vmatpush1.msra.mxu0 0.0
    %268 = vmatprep.subr.mxu0 0.0
    %269 = vmatpush1.msra.mxu0 0.0
    %270 = vmatprep.subr.mxu0 0.0
    %271 = vmatpush1.msra.mxu0 0.0
    %272 = vmatprep.subr.mxu0 0.0
    %273 = vmatpush1.msra.mxu0 0.0
    %274 = vmatprep.subr.mxu0 0.0
    %275 = vmatpush1.msra.mxu0 0.0
    %276 = vmatprep.subr.mxu0 0.0
    %277 = vmatpush1.msra.mxu0 0.0
    %278 = vmatprep.subr.mxu0 0.0
    %279 = vmatpush1.msra.mxu0 %v240
    %280 = vmatprep.subr.mxu0 0.0
    %281 = vmatpush1.msra.mxu0 %v239
    %282 = vmatprep.subr.mxu0 0.0
    %283 = vmatpush1.msra.mxu0 %v238
    %284 = vmatprep.subr.mxu0 0.0
    %285 = vmatpush1.msra.mxu0 %v237
    %286 = vmatprep.subr.mxu0 0.0
    %287 = vmatpush2.msra.mxu0 0.0
    %288 = vmatprep.subr.mxu0 0.0
    %289 = vmatpush2.msra.mxu0 0.0
    %290 = vmatprep.subr.mxu0 0.0
    %291 = vmatpush2.msra.mxu0 0.0
    %292 = vmatprep.subr.mxu0 0.0
    %293 = vmatpush2.msra.mxu0 0.0
    %294 = vmatprep.subr.mxu0 0.0
    %295 = vmatpush2.msra.mxu0 0.0
    %296 = vmatprep.subr.mxu0 0.0
    %297 = vmatpush2.msra.mxu0 0.0
    %298 = vmatprep.subr.mxu0 0.0
    %299 = vmatpush2.msra.mxu0 0.0
    %300 = vmatprep.subr.mxu0 0.0
    %301 = vmatpush2.msra.mxu0 0.0
    %302 = vmatprep.subr.mxu0 0.0
    %303 = vmatpush2.msra.mxu0 0.0
    %304 = vmatprep.subr.mxu0 0.0
    %305 = vmatpush2.msra.mxu0 0.0
    %306 = vmatprep.subr.mxu0 0.0
    %307 = vmatpush2.msra.mxu0 0.0
    %308 = vmatprep.subr.mxu0 0.0
    %309 = vmatpush2.msra.mxu0 0.0
    %310 = vmatprep.subr.mxu0 0.0
    %311 = vmatpush2.msra.mxu0 0.0
    %312 = vmatprep.subr.mxu0 0.0
    %313 = vmatpush2.msra.mxu0 0.0
    %314 = vmatprep.subr.mxu0 0.0
    %315 = vmatpush2.msra.mxu0 0.0
    %316 = vmatprep.subr.mxu0 0.0
    %317 = vmatpush2.msra.mxu0 0.0
    %318 = vmatprep.mubr.f32.mxu0 0.0
    %319 = vmatmul.mubr.f32.gmra.mxu0 %v249
    %v320 = vpop.f32.mrf.mxu0
    %v321 = vadd.f32 %v246, %v320
    %v322 = vpop.f32.mrf.mxu0
    %323 = vmatprep.mubr.f32.mxu0 0.0
    %324 = vmatmul.mubr.f32.gmra.mxu0 %v252
    %v325 = vpop.f32.mrf.mxu0
    %v326 = vadd.f32 %v246, %v325
    %v327 = vpop.f32.mrf.mxu0
    %328 = vdwg.mxu0
    %v329 = vld [vmem:[#allocation7] sm:$0xff]
    %v330 = vld [vmem:[#allocation7 + $0x8] sm:$0xff]
    %v331 = vld [vmem:[#allocation11] sm:$0xff]
    %v332 = vld [vmem:[#allocation11 + $0x8] sm:$0xff]
    %v333 = vld [vmem:[#allocation11 + $0x10] sm:$0xff]
    %v334 = vld [vmem:[#allocation11 + $0x18] sm:$0xff]
    %v335 = vld [vmem:[%s8] sm:$0x1]
    %v337 = vlaneseq
    %v338 = vshrl.u32 %v337, 7
    %v339 = vsub.s32 0, %v338
    %v340 = vrot.slane %v335, %v339
    %v343 = vsel %vm153, %v329, 0
    %v346 = vsel %vm153, %v330, 0
    %348 = vmatprep.subr.mxu0 0.0
    %349 = vmatpush1.msra.mxu0 0.0
    %350 = vmatprep.subr.mxu0 0.0
    %351 = vmatpush1.msra.mxu0 0.0
    %352 = vmatprep.subr.mxu0 0.0
    %353 = vmatpush1.msra.mxu0 0.0
    %354 = vmatprep.subr.mxu0 0.0
    %355 = vmatpush1.msra.mxu0 0.0
    %356 = vmatprep.subr.mxu0 0.0
    %357 = vmatpush1.msra.mxu0 0.0
    %358 = vmatprep.subr.mxu0 0.0
    %359 = vmatpush1.msra.mxu0 0.0
    %360 = vmatprep.subr.mxu0 0.0
    %361 = vmatpush1.msra.mxu0 0.0
    %362 = vmatprep.subr.mxu0 0.0
    %363 = vmatpush1.msra.mxu0 0.0
    %364 = vmatprep.subr.mxu0 0.0
    %365 = vmatpush1.msra.mxu0 0.0
    %366 = vmatprep.subr.mxu0 0.0
    %367 = vmatpush1.msra.mxu0 0.0
    %368 = vmatprep.subr.mxu0 0.0
    %369 = vmatpush1.msra.mxu0 0.0
    %370 = vmatprep.subr.mxu0 0.0
    %371 = vmatpush1.msra.mxu0 0.0
    %372 = vmatprep.subr.mxu0 0.0
    %373 = vmatpush1.msra.mxu0 %v334
    %374 = vmatprep.subr.mxu0 0.0
    %375 = vmatpush1.msra.mxu0 %v333
    %376 = vmatprep.subr.mxu0 0.0
    %377 = vmatpush1.msra.mxu0 %v332
    %378 = vmatprep.subr.mxu0 0.0
    %379 = vmatpush1.msra.mxu0 %v331
    %380 = vmatprep.subr.mxu0 0.0
    %381 = vmatpush2.msra.mxu0 0.0
    %382 = vmatprep.subr.mxu0 0.0
    %383 = vmatpush2.msra.mxu0 0.0
    %384 = vmatprep.subr.mxu0 0.0
    %385 = vmatpush2.msra.mxu0 0.0
    %386 = vmatprep.subr.mxu0 0.0
    %387 = vmatpush2.msra.mxu0 0.0
    %388 = vmatprep.subr.mxu0 0.0
    %389 = vmatpush2.msra.mxu0 0.0
    %390 = vmatprep.subr.mxu0 0.0
    %391 = vmatpush2.msra.mxu0 0.0
    %392 = vmatprep.subr.mxu0 0.0
    %393 = vmatpush2.msra.mxu0 0.0
    %394 = vmatprep.subr.mxu0 0.0
    %395 = vmatpush2.msra.mxu0 0.0
    %396 = vmatprep.subr.mxu0 0.0
    %397 = vmatpush2.msra.mxu0 0.0
    %398 = vmatprep.subr.mxu0 0.0
    %399 = vmatpush2.msra.mxu0 0.0
    %400 = vmatprep.subr.mxu0 0.0
    %401 = vmatpush2.msra.mxu0 0.0
    %402 = vmatprep.subr.mxu0 0.0
    %403 = vmatpush2.msra.mxu0 0.0
    %404 = vmatprep.subr.mxu0 0.0
    %405 = vmatpush2.msra.mxu0 0.0
    %406 = vmatprep.subr.mxu0 0.0
    %407 = vmatpush2.msra.mxu0 0.0
    %408 = vmatprep.subr.mxu0 0.0
    %409 = vmatpush2.msra.mxu0 0.0
    %410 = vmatprep.subr.mxu0 0.0
    %411 = vmatpush2.msra.mxu0 0.0
    %412 = vmatprep.mubr.f32.mxu0 0.0
    %413 = vmatmul.mubr.f32.gmra.mxu0 %v343
    %v414 = vpop.f32.mrf.mxu0
    %v415 = vadd.f32 %v340, %v414
    %v416 = vpop.f32.mrf.mxu0
    %417 = vmatprep.mubr.f32.mxu0 0.0
    %418 = vmatmul.mubr.f32.gmra.mxu0 %v346
    %v419 = vpop.f32.mrf.mxu0
    %v420 = vadd.f32 %v340, %v419
    %v421 = vpop.f32.mrf.mxu0
    %422 = vdwg.mxu0
    %v423 = vmul.f32 %v227, 0.35355338
    %v424 = vmul.f32 %v232, 0.35355338
    %v425 = vld [vmem:[%s11] sm:$0xff]
    %v426 = vld [vmem:[%s11 + $0x8] sm:$0xff]
    %vm427 = vcmask 64512
    %v429 = vsel %vm427, %v423, 0
    %v432 = vsel %vm427, %v424, 0
    %v435 = vsel %vm427, %v321, 0
    %v438 = vsel %vm427, %v326, 0
    %440 = vmatprep.subr.mxu0 0.0
    %441 = vmatpush1.xpose.msra.mxu0 0.0
    %442 = vmatprep.subr.mxu0 0.0
    %443 = vmatpush1.xpose.msra.mxu0 0.0
    %444 = vmatprep.subr.mxu0 0.0
    %445 = vmatpush1.xpose.msra.mxu0 0.0
    %446 = vmatprep.subr.mxu0 0.0
    %447 = vmatpush1.xpose.msra.mxu0 0.0
    %448 = vmatprep.subr.mxu0 0.0
    %449 = vmatpush1.xpose.msra.mxu0 0.0
    %450 = vmatprep.subr.mxu0 0.0
    %451 = vmatpush1.xpose.msra.mxu0 0.0
    %452 = vmatprep.subr.mxu0 0.0
    %453 = vmatpush1.xpose.msra.mxu0 0.0
    %454 = vmatprep.subr.mxu0 0.0
    %455 = vmatpush1.xpose.msra.mxu0 0.0
    %456 = vmatprep.subr.mxu0 0.0
    %457 = vmatpush1.xpose.msra.mxu0 0.0
    %458 = vmatprep.subr.mxu0 0.0
    %459 = vmatpush1.xpose.msra.mxu0 0.0
    %460 = vmatprep.subr.mxu0 0.0
    %461 = vmatpush1.xpose.msra.mxu0 0.0
    %462 = vmatprep.subr.mxu0 0.0
    %463 = vmatpush1.xpose.msra.mxu0 0.0
    %464 = vmatprep.subr.mxu0 0.0
    %465 = vmatpush1.xpose.msra.mxu0 0.0
    %466 = vmatprep.subr.mxu0 0.0
    %467 = vmatpush1.xpose.msra.mxu0 0.0
    %468 = vmatprep.subr.mxu0 0.0
    %469 = vmatpush1.xpose.msra.mxu0 %v438
    %470 = vmatprep.subr.mxu0 0.0
    %471 = vmatpush1.xpose.msra.mxu0 %v435
    %472 = vmatprep.subr.mxu0 0.0
    %473 = vmatpush2.xpose.msra.mxu0 0.0
    %474 = vmatprep.subr.mxu0 0.0
    %475 = vmatpush2.xpose.msra.mxu0 0.0
    %476 = vmatprep.subr.mxu0 0.0
    %477 = vmatpush2.xpose.msra.mxu0 0.0
    %478 = vmatprep.subr.mxu0 0.0
    %479 = vmatpush2.xpose.msra.mxu0 0.0
    %480 = vmatprep.subr.mxu0 0.0
    %481 = vmatpush2.xpose.msra.mxu0 0.0
    %482 = vmatprep.subr.mxu0 0.0
    %483 = vmatpush2.xpose.msra.mxu0 0.0
    %484 = vmatprep.subr.mxu0 0.0
    %485 = vmatpush2.xpose.msra.mxu0 0.0
    %486 = vmatprep.subr.mxu0 0.0
    %487 = vmatpush2.xpose.msra.mxu0 0.0
    %488 = vmatprep.subr.mxu0 0.0
    %489 = vmatpush2.xpose.msra.mxu0 0.0
    %490 = vmatprep.subr.mxu0 0.0
    %491 = vmatpush2.xpose.msra.mxu0 0.0
    %492 = vmatprep.subr.mxu0 0.0
    %493 = vmatpush2.xpose.msra.mxu0 0.0
    %494 = vmatprep.subr.mxu0 0.0
    %495 = vmatpush2.xpose.msra.mxu0 0.0
    %496 = vmatprep.subr.mxu0 0.0
    %497 = vmatpush2.xpose.msra.mxu0 0.0
    %498 = vmatprep.subr.mxu0 0.0
    %499 = vmatpush2.xpose.msra.mxu0 0.0
    %500 = vmatprep.subr.mxu0 0.0
    %501 = vmatpush2.xpose.msra.mxu0 0.0
    %502 = vmatprep.subr.mxu0 0.0
    %503 = vmatpush2.xpose.msra.mxu0 0.0
    %504 = vmatprep.mubr.f32.mxu0 0.0
    %505 = vmatmul.mubr.f32.gmra.mxu0 %v429
    %v506 = vpop.f32.mrf.mxu0
    %v507 = vadd.f32 %v425, %v506
    %v508 = vpop.f32.mrf.mxu0
    %509 = vmatprep.mubr.f32.mxu0 0.0
    %510 = vmatmul.mubr.f32.gmra.mxu0 %v432
    %v511 = vpop.f32.mrf.mxu0
    %v512 = vadd.f32 %v426, %v511
    %v513 = vpop.f32.mrf.mxu0
    %514 = vdwg.mxu0
    %vm515 = vcmask 130048
    %v516 = vsel %vm515, %v507, -inf
    %517 = vmax.xlane.f32.xlu0 %v516
    %v518 = vpop.xlane.xlu0 %517
    %v519 = vsel %vm515, %v512, -inf
    %520 = vmax.xlane.f32.xlu0 %v519
    %v521 = vpop.xlane.xlu0 %520
    %v522 = vsub.f32 %v507, %v518
    %v523 = vsub.f32 %v512, %v521
    %v524 = vmul.f32 %v522, 1.442695
    %v525 = vpow.pop %v524
    %v526 = vmul.f32 %v523, 1.442695
    %v527 = vpow.pop %v526
    %v528 = vsel %vm515, %v525, 0.0
    %529 = vadd.xlane.f32.xlu0 %v528
    %v530 = vpop.xlane.xlu0 %529
    %v531 = vsel %vm515, %v527, 0.0
    %532 = vadd.xlane.f32.xlu0 %v531
    %v533 = vpop.xlane.xlu0 %532
    %v534 = vrcp.pop %v530
    %v535 = vmul.f32 %v525, %v534
    %v536 = vrcp.pop %v533
    %v537 = vmul.f32 %v527, %v536
    %v538 = vadd.f32 %v535, 0.0
    %v539 = vadd.f32 %v537, 0.0
    %v541 = vsel %vm515, %v535, 0
    %v544 = vsel %vm515, %v537, 0
    %546 = vmatprep.subr.mxu0 0.0
    %547 = vmatpush1.msra.mxu0 0.0
    %548 = vmatprep.subr.mxu0 0.0
    %549 = vmatpush1.msra.mxu0 0.0
    %550 = vmatprep.subr.mxu0 0.0
    %551 = vmatpush1.msra.mxu0 0.0
    %552 = vmatprep.subr.mxu0 0.0
    %553 = vmatpush1.msra.mxu0 0.0
    %554 = vmatprep.subr.mxu0 0.0
    %555 = vmatpush1.msra.mxu0 0.0
    %556 = vmatprep.subr.mxu0 0.0
    %557 = vmatpush1.msra.mxu0 0.0
    %558 = vmatprep.subr.mxu0 0.0
    %559 = vmatpush1.msra.mxu0 0.0
    %560 = vmatprep.subr.mxu0 0.0
    %561 = vmatpush1.msra.mxu0 0.0
    %562 = vmatprep.subr.mxu0 0.0
    %563 = vmatpush1.msra.mxu0 0.0
    %564 = vmatprep.subr.mxu0 0.0
    %565 = vmatpush1.msra.mxu0 0.0
    %566 = vmatprep.subr.mxu0 0.0
    %567 = vmatpush1.msra.mxu0 0.0
    %568 = vmatprep.subr.mxu0 0.0
    %569 = vmatpush1.msra.mxu0 0.0
    %570 = vmatprep.subr.mxu0 0.0
    %571 = vmatpush1.msra.mxu0 0.0
    %572 = vmatprep.subr.mxu0 0.0
    %573 = vmatpush1.msra.mxu0 0.0
    %574 = vmatprep.subr.mxu0 0.0
    %575 = vmatpush1.msra.mxu0 %v420
    %576 = vmatprep.subr.mxu0 0.0
    %577 = vmatpush1.msra.mxu0 %v415
    %578 = vmatprep.subr.mxu0 0.0
    %579 = vmatpush2.msra.mxu0 0.0
    %580 = vmatprep.subr.mxu0 0.0
    %581 = vmatpush2.msra.mxu0 0.0
    %582 = vmatprep.subr.mxu0 0.0
    %583 = vmatpush2.msra.mxu0 0.0
    %584 = vmatprep.subr.mxu0 0.0
    %585 = vmatpush2.msra.mxu0 0.0
    %586 = vmatprep.subr.mxu0 0.0
    %587 = vmatpush2.msra.mxu0 0.0
    %588 = vmatprep.subr.mxu0 0.0
    %589 = vmatpush2.msra.mxu0 0.0
    %590 = vmatprep.subr.mxu0 0.0
    %591 = vmatpush2.msra.mxu0 0.0
    %592 = vmatprep.subr.mxu0 0.0
    %593 = vmatpush2.msra.mxu0 0.0
    %594 = vmatprep.subr.mxu0 0.0
    %595 = vmatpush2.msra.mxu0 0.0
    %596 = vmatprep.subr.mxu0 0.0
    %597 = vmatpush2.msra.mxu0 0.0
    %598 = vmatprep.subr.mxu0 0.0
    %599 = vmatpush2.msra.mxu0 0.0
    %600 = vmatprep.subr.mxu0 0.0
    %601 = vmatpush2.msra.mxu0 0.0
    %602 = vmatprep.subr.mxu0 0.0
    %603 = vmatpush2.msra.mxu0 0.0
    %604 = vmatprep.subr.mxu0 0.0
    %605 = vmatpush2.msra.mxu0 0.0
    %606 = vmatprep.subr.mxu0 0.0
    %607 = vmatpush2.msra.mxu0 0.0
    %608 = vmatprep.subr.mxu0 0.0
    %609 = vmatpush2.msra.mxu0 0.0
    %610 = vmatprep.mubr.f32.mxu0 0.0
    %611 = vmatmul.mubr.f32.gmra.mxu0 %v541
    %v612 = vpop.f32.mrf.mxu0
    %v613 = vadd.f32 0.0, %v612
    %v614 = vpop.f32.mrf.mxu0
    %615 = vmatprep.mubr.f32.mxu0 0.0
    %616 = vmatmul.mubr.f32.gmra.mxu0 %v544
    %v617 = vpop.f32.mrf.mxu0
    %v618 = vadd.f32 0.0, %v617
    %v619 = vpop.f32.mrf.mxu0
    %620 = vdwg.mxu0
    %621 = vrot.lane.b32.xlu0 %v423, 120
    %v622 = vpop.permute.xlu0 %621
    %623 = vrot.lane.b32.xlu0 %v424, 120
    %v624 = vpop.permute.xlu0 %623
    %625 = vrot.lane.b32.xlu0 %v321, 120
    %v626 = vpop.permute.xlu0 %625
    %627 = vrot.lane.b32.xlu0 %v326, 120
    %v628 = vpop.permute.xlu0 %627
    %v629 = vsel %vm427, %v622, 0
    %v631 = vsel %vm427, %v624, 0
    %v633 = vsel %vm427, %v626, 0
    %v635 = vsel %vm427, %v628, 0
    %637 = vmatprep.subr.mxu0 0.0
    %638 = vmatpush1.xpose.msra.mxu0 0.0
    %639 = vmatprep.subr.mxu0 0.0
    %640 = vmatpush1.xpose.msra.mxu0 0.0
    %641 = vmatprep.subr.mxu0 0.0
    %642 = vmatpush1.xpose.msra.mxu0 0.0
    %643 = vmatprep.subr.mxu0 0.0
    %644 = vmatpush1.xpose.msra.mxu0 0.0
    %645 = vmatprep.subr.mxu0 0.0
    %646 = vmatpush1.xpose.msra.mxu0 0.0
    %647 = vmatprep.subr.mxu0 0.0
    %648 = vmatpush1.xpose.msra.mxu0 0.0
    %649 = vmatprep.subr.mxu0 0.0
    %650 = vmatpush1.xpose.msra.mxu0 0.0
    %651 = vmatprep.subr.mxu0 0.0
    %652 = vmatpush1.xpose.msra.mxu0 0.0
    %653 = vmatprep.subr.mxu0 0.0
    %654 = vmatpush1.xpose.msra.mxu0 0.0
    %655 = vmatprep.subr.mxu0 0.0
    %656 = vmatpush1.xpose.msra.mxu0 0.0
    %657 = vmatprep.subr.mxu0 0.0
    %658 = vmatpush1.xpose.msra.mxu0 0.0
    %659 = vmatprep.subr.mxu0 0.0
    %660 = vmatpush1.xpose.msra.mxu0 0.0
    %661 = vmatprep.subr.mxu0 0.0
    %662 = vmatpush1.xpose.msra.mxu0 0.0
    %663 = vmatprep.subr.mxu0 0.0
    %664 = vmatpush1.xpose.msra.mxu0 0.0
    %665 = vmatprep.subr.mxu0 0.0
    %666 = vmatpush1.xpose.msra.mxu0 %v635
    %667 = vmatprep.subr.mxu0 0.0
    %668 = vmatpush1.xpose.msra.mxu0 %v633
    %669 = vmatprep.subr.mxu0 0.0
    %670 = vmatpush2.xpose.msra.mxu0 0.0
    %671 = vmatprep.subr.mxu0 0.0
    %672 = vmatpush2.xpose.msra.mxu0 0.0
    %673 = vmatprep.subr.mxu0 0.0
    %674 = vmatpush2.xpose.msra.mxu0 0.0
    %675 = vmatprep.subr.mxu0 0.0
    %676 = vmatpush2.xpose.msra.mxu0 0.0
    %677 = vmatprep.subr.mxu0 0.0
    %678 = vmatpush2.xpose.msra.mxu0 0.0
    %679 = vmatprep.subr.mxu0 0.0
    %680 = vmatpush2.xpose.msra.mxu0 0.0
    %681 = vmatprep.subr.mxu0 0.0
    %682 = vmatpush2.xpose.msra.mxu0 0.0
    %683 = vmatprep.subr.mxu0 0.0
    %684 = vmatpush2.xpose.msra.mxu0 0.0
    %685 = vmatprep.subr.mxu0 0.0
    %686 = vmatpush2.xpose.msra.mxu0 0.0
    %687 = vmatprep.subr.mxu0 0.0
    %688 = vmatpush2.xpose.msra.mxu0 0.0
    %689 = vmatprep.subr.mxu0 0.0
    %690 = vmatpush2.xpose.msra.mxu0 0.0
    %691 = vmatprep.subr.mxu0 0.0
    %692 = vmatpush2.xpose.msra.mxu0 0.0
    %693 = vmatprep.subr.mxu0 0.0
    %694 = vmatpush2.xpose.msra.mxu0 0.0
    %695 = vmatprep.subr.mxu0 0.0
    %696 = vmatpush2.xpose.msra.mxu0 0.0
    %697 = vmatprep.subr.mxu0 0.0
    %698 = vmatpush2.xpose.msra.mxu0 0.0
    %699 = vmatprep.subr.mxu0 0.0
    %700 = vmatpush2.xpose.msra.mxu0 0.0
    %701 = vmatprep.mubr.f32.mxu0 0.0
    %702 = vmatmul.mubr.f32.gmra.mxu0 %v629
    %v703 = vpop.f32.mrf.mxu0
    %v704 = vadd.f32 %v425, %v703
    %v705 = vpop.f32.mrf.mxu0
    %706 = vmatprep.mubr.f32.mxu0 0.0
    %707 = vmatmul.mubr.f32.gmra.mxu0 %v631
    %v708 = vpop.f32.mrf.mxu0
    %v709 = vadd.f32 %v426, %v708
    %v710 = vpop.f32.mrf.mxu0
    %711 = vdwg.mxu0
    %v712 = vsel %vm515, %v704, -inf
    %713 = vmax.xlane.f32.xlu0 %v712
    %v714 = vpop.xlane.xlu0 %713
    %v715 = vsel %vm515, %v709, -inf
    %716 = vmax.xlane.f32.xlu0 %v715
    %v717 = vpop.xlane.xlu0 %716
    %v718 = vsub.f32 %v704, %v714
    %v719 = vsub.f32 %v709, %v717
    %v720 = vmul.f32 %v718, 1.442695
    %v721 = vpow.pop %v720
    %v722 = vmul.f32 %v719, 1.442695
    %v723 = vpow.pop %v722
    %v724 = vsel %vm515, %v721, 0.0
    %725 = vadd.xlane.f32.xlu0 %v724
    %v726 = vpop.xlane.xlu0 %725
    %v727 = vsel %vm515, %v723, 0.0
    %728 = vadd.xlane.f32.xlu0 %v727
    %v729 = vpop.xlane.xlu0 %728
    %v730 = vrcp.pop %v726
    %v731 = vmul.f32 %v721, %v730
    %v732 = vrcp.pop %v729
    %v733 = vmul.f32 %v723, %v732
    %v734 = vadd.f32 %v538, %v731
    %v735 = vadd.f32 %v539, %v733
    %738 = vrot.lane.b32.xlu0 %v415, 120
    %v739 = vpop.permute.xlu0 %738
    %740 = vrot.lane.b32.xlu0 %v420, 120
    %v741 = vpop.permute.xlu0 %740
    %v745 = vsel %vm515, %v731, 0
    %v748 = vsel %vm515, %v733, 0
    %750 = vmatprep.subr.mxu0 0.0
    %751 = vmatpush1.msra.mxu0 0.0
    %752 = vmatprep.subr.mxu0 0.0
    %753 = vmatpush1.msra.mxu0 0.0
    %754 = vmatprep.subr.mxu0 0.0
    %755 = vmatpush1.msra.mxu0 0.0
    %756 = vmatprep.subr.mxu0 0.0
    %757 = vmatpush1.msra.mxu0 0.0
    %758 = vmatprep.subr.mxu0 0.0
    %759 = vmatpush1.msra.mxu0 0.0
    %760 = vmatprep.subr.mxu0 0.0
    %761 = vmatpush1.msra.mxu0 0.0
    %762 = vmatprep.subr.mxu0 0.0
    %763 = vmatpush1.msra.mxu0 0.0
    %764 = vmatprep.subr.mxu0 0.0
    %765 = vmatpush1.msra.mxu0 0.0
    %766 = vmatprep.subr.mxu0 0.0
    %767 = vmatpush1.msra.mxu0 0.0
    %768 = vmatprep.subr.mxu0 0.0
    %769 = vmatpush1.msra.mxu0 0.0
    %770 = vmatprep.subr.mxu0 0.0
    %771 = vmatpush1.msra.mxu0 0.0
    %772 = vmatprep.subr.mxu0 0.0
    %773 = vmatpush1.msra.mxu0 0.0
    %774 = vmatprep.subr.mxu0 0.0
    %775 = vmatpush1.msra.mxu0 0.0
    %776 = vmatprep.subr.mxu0 0.0
    %777 = vmatpush1.msra.mxu0 0.0
    %778 = vmatprep.subr.mxu0 0.0
    %779 = vmatpush1.msra.mxu0 %v741
    %780 = vmatprep.subr.mxu0 0.0
    %781 = vmatpush1.msra.mxu0 %v739
    %782 = vmatprep.subr.mxu0 0.0
    %783 = vmatpush2.msra.mxu0 0.0
    %784 = vmatprep.subr.mxu0 0.0
    %785 = vmatpush2.msra.mxu0 0.0
    %786 = vmatprep.subr.mxu0 0.0
    %787 = vmatpush2.msra.mxu0 0.0
    %788 = vmatprep.subr.mxu0 0.0
    %789 = vmatpush2.msra.mxu0 0.0
    %790 = vmatprep.subr.mxu0 0.0
    %791 = vmatpush2.msra.mxu0 0.0
    %792 = vmatprep.subr.mxu0 0.0
    %793 = vmatpush2.msra.mxu0 0.0
    %794 = vmatprep.subr.mxu0 0.0
    %795 = vmatpush2.msra.mxu0 0.0
    %796 = vmatprep.subr.mxu0 0.0
    %797 = vmatpush2.msra.mxu0 0.0
    %798 = vmatprep.subr.mxu0 0.0
    %799 = vmatpush2.msra.mxu0 0.0
    %800 = vmatprep.subr.mxu0 0.0
    %801 = vmatpush2.msra.mxu0 0.0
    %802 = vmatprep.subr.mxu0 0.0
    %803 = vmatpush2.msra.mxu0 0.0
    %804 = vmatprep.subr.mxu0 0.0
    %805 = vmatpush2.msra.mxu0 0.0
    %806 = vmatprep.subr.mxu0 0.0
    %807 = vmatpush2.msra.mxu0 0.0
    %808 = vmatprep.subr.mxu0 0.0
    %809 = vmatpush2.msra.mxu0 0.0
    %810 = vmatprep.subr.mxu0 0.0
    %811 = vmatpush2.msra.mxu0 0.0
    %812 = vmatprep.subr.mxu0 0.0
    %813 = vmatpush2.msra.mxu0 0.0
    %814 = vmatprep.mubr.f32.mxu0 0.0
    %815 = vmatmul.mubr.f32.gmra.mxu0 %v745
    %v816 = vpop.f32.mrf.mxu0
    %v817 = vadd.f32 0.0, %v816
    %v818 = vpop.f32.mrf.mxu0
    %819 = vmatprep.mubr.f32.mxu0 0.0
    %820 = vmatmul.mubr.f32.gmra.mxu0 %v748
    %v821 = vpop.f32.mrf.mxu0
    %v822 = vadd.f32 0.0, %v821
    %v823 = vpop.f32.mrf.mxu0
    %824 = vdwg.mxu0
    %825 = vrot.lane.b32.xlu0 %v423, 112
    %v826 = vpop.permute.xlu0 %825
    %827 = vrot.lane.b32.xlu0 %v424, 112
    %v828 = vpop.permute.xlu0 %827
    %829 = vrot.lane.b32.xlu0 %v321, 112
    %v830 = vpop.permute.xlu0 %829
    %831 = vrot.lane.b32.xlu0 %v326, 112
    %v832 = vpop.permute.xlu0 %831
    %v833 = vsel %vm427, %v826, 0
    %v835 = vsel %vm427, %v828, 0
    %v837 = vsel %vm427, %v830, 0
    %v839 = vsel %vm427, %v832, 0
    %841 = vmatprep.subr.mxu0 0.0
    %842 = vmatpush1.xpose.msra.mxu0 0.0
    %843 = vmatprep.subr.mxu0 0.0
    %844 = vmatpush1.xpose.msra.mxu0 0.0
    %845 = vmatprep.subr.mxu0 0.0
    %846 = vmatpush1.xpose.msra.mxu0 0.0
    %847 = vmatprep.subr.mxu0 0.0
    %848 = vmatpush1.xpose.msra.mxu0 0.0
    %849 = vmatprep.subr.mxu0 0.0
    %850 = vmatpush1.xpose.msra.mxu0 0.0
    %851 = vmatprep.subr.mxu0 0.0
    %852 = vmatpush1.xpose.msra.mxu0 0.0
    %853 = vmatprep.subr.mxu0 0.0
    %854 = vmatpush1.xpose.msra.mxu0 0.0
    %855 = vmatprep.subr.mxu0 0.0
    %856 = vmatpush1.xpose.msra.mxu0 0.0
    %857 = vmatprep.subr.mxu0 0.0
    %858 = vmatpush1.xpose.msra.mxu0 0.0
    %859 = vmatprep.subr.mxu0 0.0
    %860 = vmatpush1.xpose.msra.mxu0 0.0
    %861 = vmatprep.subr.mxu0 0.0
    %862 = vmatpush1.xpose.msra.mxu0 0.0
    %863 = vmatprep.subr.mxu0 0.0
    %864 = vmatpush1.xpose.msra.mxu0 0.0
    %865 = vmatprep.subr.mxu0 0.0
    %866 = vmatpush1.xpose.msra.mxu0 0.0
    %867 = vmatprep.subr.mxu0 0.0
    %868 = vmatpush1.xpose.msra.mxu0 0.0
    %869 = vmatprep.subr.mxu0 0.0
    %870 = vmatpush1.xpose.msra.mxu0 %v839
    %871 = vmatprep.subr.mxu0 0.0
    %872 = vmatpush1.xpose.msra.mxu0 %v837
    %873 = vmatprep.subr.mxu0 0.0
    %874 = vmatpush2.xpose.msra.mxu0 0.0
    %875 = vmatprep.subr.mxu0 0.0
    %876 = vmatpush2.xpose.msra.mxu0 0.0
    %877 = vmatprep.subr.mxu0 0.0
    %878 = vmatpush2.xpose.msra.mxu0 0.0
    %879 = vmatprep.subr.mxu0 0.0
    %880 = vmatpush2.xpose.msra.mxu0 0.0
    %881 = vmatprep.subr.mxu0 0.0
    %882 = vmatpush2.xpose.msra.mxu0 0.0
    %883 = vmatprep.subr.mxu0 0.0
    %884 = vmatpush2.xpose.msra.mxu0 0.0
    %885 = vmatprep.subr.mxu0 0.0
    %886 = vmatpush2.xpose.msra.mxu0 0.0
    %887 = vmatprep.subr.mxu0 0.0
    %888 = vmatpush2.xpose.msra.mxu0 0.0
    %889 = vmatprep.subr.mxu0 0.0
    %890 = vmatpush2.xpose.msra.mxu0 0.0
    %891 = vmatprep.subr.mxu0 0.0
    %892 = vmatpush2.xpose.msra.mxu0 0.0
    %893 = vmatprep.subr.mxu0 0.0
    %894 = vmatpush2.xpose.msra.mxu0 0.0
    %895 = vmatprep.subr.mxu0 0.0
    %896 = vmatpush2.xpose.msra.mxu0 0.0
    %897 = vmatprep.subr.mxu0 0.0
    %898 = vmatpush2.xpose.msra.mxu0 0.0
    %899 = vmatprep.subr.mxu0 0.0
    %900 = vmatpush2.xpose.msra.mxu0 0.0
    %901 = vmatprep.subr.mxu0 0.0
    %902 = vmatpush2.xpose.msra.mxu0 0.0
    %903 = vmatprep.subr.mxu0 0.0
    %904 = vmatpush2.xpose.msra.mxu0 0.0
    %905 = vmatprep.mubr.f32.mxu0 0.0
    %906 = vmatmul.mubr.f32.gmra.mxu0 %v833
    %v907 = vpop.f32.mrf.mxu0
    %v908 = vadd.f32 %v425, %v907
    %v909 = vpop.f32.mrf.mxu0
    %910 = vmatprep.mubr.f32.mxu0 0.0
    %911 = vmatmul.mubr.f32.gmra.mxu0 %v835
    %v912 = vpop.f32.mrf.mxu0
    %v913 = vadd.f32 %v426, %v912
    %v914 = vpop.f32.mrf.mxu0
    %915 = vdwg.mxu0
    %v916 = vsel %vm515, %v908, -inf
    %917 = vmax.xlane.f32.xlu0 %v916
    %v918 = vpop.xlane.xlu0 %917
    %v919 = vsel %vm515, %v913, -inf
    %920 = vmax.xlane.f32.xlu0 %v919
    %v921 = vpop.xlane.xlu0 %920
    %v922 = vsub.f32 %v908, %v918
    %v923 = vsub.f32 %v913, %v921
    %v924 = vmul.f32 %v922, 1.442695
    %v925 = vpow.pop %v924
    %v926 = vmul.f32 %v923, 1.442695
    %v927 = vpow.pop %v926
    %v928 = vsel %vm515, %v925, 0.0
    %929 = vadd.xlane.f32.xlu0 %v928
    %v930 = vpop.xlane.xlu0 %929
    %v931 = vsel %vm515, %v927, 0.0
    %932 = vadd.xlane.f32.xlu0 %v931
    %v933 = vpop.xlane.xlu0 %932
    %v934 = vrcp.pop %v930
    %v935 = vmul.f32 %v925, %v934
    %v936 = vrcp.pop %v933
    %v937 = vmul.f32 %v927, %v936
    %v938 = vadd.f32 %v734, %v935
    %v939 = vadd.f32 %v735, %v937
    %940 = vrot.lane.b32.xlu0 %v415, 112
    %v941 = vpop.permute.xlu0 %940
    %942 = vrot.lane.b32.xlu0 %v420, 112
    %v943 = vpop.permute.xlu0 %942
    %v947 = vsel %vm515, %v935, 0
    %v950 = vsel %vm515, %v937, 0
    %952 = vmatprep.subr.mxu0 0.0
    %953 = vmatpush1.msra.mxu0 0.0
    %954 = vmatprep.subr.mxu0 0.0
    %955 = vmatpush1.msra.mxu0 0.0
    %956 = vmatprep.subr.mxu0 0.0
    %957 = vmatpush1.msra.mxu0 0.0
    %958 = vmatprep.subr.mxu0 0.0
    %959 = vmatpush1.msra.mxu0 0.0
    %960 = vmatprep.subr.mxu0 0.0
    %961 = vmatpush1.msra.mxu0 0.0
    %962 = vmatprep.subr.mxu0 0.0
    %963 = vmatpush1.msra.mxu0 0.0
    %964 = vmatprep.subr.mxu0 0.0
    %965 = vmatpush1.msra.mxu0 0.0
    %966 = vmatprep.subr.mxu0 0.0
    %967 = vmatpush1.msra.mxu0 0.0
    %968 = vmatprep.subr.mxu0 0.0
    %969 = vmatpush1.msra.mxu0 0.0
    %970 = vmatprep.subr.mxu0 0.0
    %971 = vmatpush1.msra.mxu0 0.0
    %972 = vmatprep.subr.mxu0 0.0
    %973 = vmatpush1.msra.mxu0 0.0
    %974 = vmatprep.subr.mxu0 0.0
    %975 = vmatpush1.msra.mxu0 0.0
    %976 = vmatprep.subr.mxu0 0.0
    %977 = vmatpush1.msra.mxu0 0.0
    %978 = vmatprep.subr.mxu0 0.0
    %979 = vmatpush1.msra.mxu0 0.0
    %980 = vmatprep.subr.mxu0 0.0
    %981 = vmatpush1.msra.mxu0 %v943
    %982 = vmatprep.subr.mxu0 0.0
    %983 = vmatpush1.msra.mxu0 %v941
    %984 = vmatprep.subr.mxu0 0.0
    %985 = vmatpush2.msra.mxu0 0.0
    %986 = vmatprep.subr.mxu0 0.0
    %987 = vmatpush2.msra.mxu0 0.0
    %988 = vmatprep.subr.mxu0 0.0
    %989 = vmatpush2.msra.mxu0 0.0
    %990 = vmatprep.subr.mxu0 0.0
    %991 = vmatpush2.msra.mxu0 0.0
    %992 = vmatprep.subr.mxu0 0.0
    %993 = vmatpush2.msra.mxu0 0.0
    %994 = vmatprep.subr.mxu0 0.0
    %995 = vmatpush2.msra.mxu0 0.0
    %996 = vmatprep.subr.mxu0 0.0
    %997 = vmatpush2.msra.mxu0 0.0
    %998 = vmatprep.subr.mxu0 0.0
    %999 = vmatpush2.msra.mxu0 0.0
    %1000 = vmatprep.subr.mxu0 0.0
    %1001 = vmatpush2.msra.mxu0 0.0
    %1002 = vmatprep.subr.mxu0 0.0
    %1003 = vmatpush2.msra.mxu0 0.0
    %1004 = vmatprep.subr.mxu0 0.0
    %1005 = vmatpush2.msra.mxu0 0.0
    %1006 = vmatprep.subr.mxu0 0.0
    %1007 = vmatpush2.msra.mxu0 0.0
    %1008 = vmatprep.subr.mxu0 0.0
    %1009 = vmatpush2.msra.mxu0 0.0
    %1010 = vmatprep.subr.mxu0 0.0
    %1011 = vmatpush2.msra.mxu0 0.0
    %1012 = vmatprep.subr.mxu0 0.0
    %1013 = vmatpush2.msra.mxu0 0.0
    %1014 = vmatprep.subr.mxu0 0.0
    %1015 = vmatpush2.msra.mxu0 0.0
    %1016 = vmatprep.mubr.f32.mxu0 0.0
    %1017 = vmatmul.mubr.f32.gmra.mxu0 %v947
    %v1018 = vpop.f32.mrf.mxu0
    %v1019 = vadd.f32 0.0, %v1018
    %v1020 = vpop.f32.mrf.mxu0
    %1021 = vmatprep.mubr.f32.mxu0 0.0
    %1022 = vmatmul.mubr.f32.gmra.mxu0 %v950
    %v1023 = vpop.f32.mrf.mxu0
    %v1024 = vadd.f32 0.0, %v1023
    %v1025 = vpop.f32.mrf.mxu0
    %1026 = vdwg.mxu0
    %1027 = vrot.lane.b32.xlu0 %v423, 104
    %v1028 = vpop.permute.xlu0 %1027
    %1029 = vrot.lane.b32.xlu0 %v424, 104
    %v1030 = vpop.permute.xlu0 %1029
    %1031 = vrot.lane.b32.xlu0 %v321, 104
    %v1032 = vpop.permute.xlu0 %1031
    %1033 = vrot.lane.b32.xlu0 %v326, 104
    %v1034 = vpop.permute.xlu0 %1033
    %v1035 = vsel %vm427, %v1028, 0
    %v1037 = vsel %vm427, %v1030, 0
    %v1039 = vsel %vm427, %v1032, 0
    %v1041 = vsel %vm427, %v1034, 0
    %1043 = vmatprep.subr.mxu0 0.0
    %1044 = vmatpush1.xpose.msra.mxu0 0.0
    %1045 = vmatprep.subr.mxu0 0.0
    %1046 = vmatpush1.xpose.msra.mxu0 0.0
    %1047 = vmatprep.subr.mxu0 0.0
    %1048 = vmatpush1.xpose.msra.mxu0 0.0
    %1049 = vmatprep.subr.mxu0 0.0
    %1050 = vmatpush1.xpose.msra.mxu0 0.0
    %1051 = vmatprep.subr.mxu0 0.0
    %1052 = vmatpush1.xpose.msra.mxu0 0.0
    %1053 = vmatprep.subr.mxu0 0.0
    %1054 = vmatpush1.xpose.msra.mxu0 0.0
    %1055 = vmatprep.subr.mxu0 0.0
    %1056 = vmatpush1.xpose.msra.mxu0 0.0
    %1057 = vmatprep.subr.mxu0 0.0
    %1058 = vmatpush1.xpose.msra.mxu0 0.0
    %1059 = vmatprep.subr.mxu0 0.0
    %1060 = vmatpush1.xpose.msra.mxu0 0.0
    %1061 = vmatprep.subr.mxu0 0.0
    %1062 = vmatpush1.xpose.msra.mxu0 0.0
    %1063 = vmatprep.subr.mxu0 0.0
    %1064 = vmatpush1.xpose.msra.mxu0 0.0
    %1065 = vmatprep.subr.mxu0 0.0
    %1066 = vmatpush1.xpose.msra.mxu0 0.0
    %1067 = vmatprep.subr.mxu0 0.0
    %1068 = vmatpush1.xpose.msra.mxu0 0.0
    %1069 = vmatprep.subr.mxu0 0.0
    %1070 = vmatpush1.xpose.msra.mxu0 0.0
    %1071 = vmatprep.subr.mxu0 0.0
    %1072 = vmatpush1.xpose.msra.mxu0 %v1041
    %1073 = vmatprep.subr.mxu0 0.0
    %1074 = vmatpush1.xpose.msra.mxu0 %v1039
    %1075 = vmatprep.subr.mxu0 0.0
    %1076 = vmatpush2.xpose.msra.mxu0 0.0
    %1077 = vmatprep.subr.mxu0 0.0
    %1078 = vmatpush2.xpose.msra.mxu0 0.0
    %1079 = vmatprep.subr.mxu0 0.0
    %1080 = vmatpush2.xpose.msra.mxu0 0.0
    %1081 = vmatprep.subr.mxu0 0.0
    %1082 = vmatpush2.xpose.msra.mxu0 0.0
    %1083 = vmatprep.subr.mxu0 0.0
    %1084 = vmatpush2.xpose.msra.mxu0 0.0
    %1085 = vmatprep.subr.mxu0 0.0
    %1086 = vmatpush2.xpose.msra.mxu0 0.0
    %1087 = vmatprep.subr.mxu0 0.0
    %1088 = vmatpush2.xpose.msra.mxu0 0.0
    %1089 = vmatprep.subr.mxu0 0.0
    %1090 = vmatpush2.xpose.msra.mxu0 0.0
    %1091 = vmatprep.subr.mxu0 0.0
    %1092 = vmatpush2.xpose.msra.mxu0 0.0
    %1093 = vmatprep.subr.mxu0 0.0
    %1094 = vmatpush2.xpose.msra.mxu0 0.0
    %1095 = vmatprep.subr.mxu0 0.0
    %1096 = vmatpush2.xpose.msra.mxu0 0.0
    %1097 = vmatprep.subr.mxu0 0.0
    %1098 = vmatpush2.xpose.msra.mxu0 0.0
    %1099 = vmatprep.subr.mxu0 0.0
    %1100 = vmatpush2.xpose.msra.mxu0 0.0
    %1101 = vmatprep.subr.mxu0 0.0
    %1102 = vmatpush2.xpose.msra.mxu0 0.0
    %1103 = vmatprep.subr.mxu0 0.0
    %1104 = vmatpush2.xpose.msra.mxu0 0.0
    %1105 = vmatprep.subr.mxu0 0.0
    %1106 = vmatpush2.xpose.msra.mxu0 0.0
    %1107 = vmatprep.mubr.f32.mxu0 0.0
    %1108 = vmatmul.mubr.f32.gmra.mxu0 %v1035
    %v1109 = vpop.f32.mrf.mxu0
    %v1110 = vadd.f32 %v425, %v1109
    %v1111 = vpop.f32.mrf.mxu0
    %1112 = vmatprep.mubr.f32.mxu0 0.0
    %1113 = vmatmul.mubr.f32.gmra.mxu0 %v1037
    %v1114 = vpop.f32.mrf.mxu0
    %v1115 = vadd.f32 %v426, %v1114
    %v1116 = vpop.f32.mrf.mxu0
    %1117 = vdwg.mxu0
    %v1118 = vsel %vm515, %v1110, -inf
    %1119 = vmax.xlane.f32.xlu0 %v1118
    %v1120 = vpop.xlane.xlu0 %1119
    %v1121 = vsel %vm515, %v1115, -inf
    %1122 = vmax.xlane.f32.xlu0 %v1121
    %v1123 = vpop.xlane.xlu0 %1122
    %v1124 = vsub.f32 %v1110, %v1120
    %v1125 = vsub.f32 %v1115, %v1123
    %v1126 = vmul.f32 %v1124, 1.442695
    %v1127 = vpow.pop %v1126
    %v1128 = vmul.f32 %v1125, 1.442695
    %v1129 = vpow.pop %v1128
    %v1130 = vsel %vm515, %v1127, 0.0
    %1131 = vadd.xlane.f32.xlu0 %v1130
    %v1132 = vpop.xlane.xlu0 %1131
    %v1133 = vsel %vm515, %v1129, 0.0
    %1134 = vadd.xlane.f32.xlu0 %v1133
    %v1135 = vpop.xlane.xlu0 %1134
    %v1136 = vrcp.pop %v1132
    %v1137 = vmul.f32 %v1127, %v1136
    %v1138 = vrcp.pop %v1135
    %v1139 = vmul.f32 %v1129, %v1138
    %v1140 = vadd.f32 %v938, %v1137
    %v1141 = vadd.f32 %v939, %v1139
    %1142 = vrot.lane.b32.xlu0 %v415, 104
    %v1143 = vpop.permute.xlu0 %1142
    %1144 = vrot.lane.b32.xlu0 %v420, 104
    %v1145 = vpop.permute.xlu0 %1144
    %v1149 = vsel %vm515, %v1137, 0
    %v1152 = vsel %vm515, %v1139, 0
    %1154 = vmatprep.subr.mxu0 0.0
    %1155 = vmatpush1.msra.mxu0 0.0
    %1156 = vmatprep.subr.mxu0 0.0
    %1157 = vmatpush1.msra.mxu0 0.0
    %1158 = vmatprep.subr.mxu0 0.0
    %1159 = vmatpush1.msra.mxu0 0.0
    %1160 = vmatprep.subr.mxu0 0.0
    %1161 = vmatpush1.msra.mxu0 0.0
    %1162 = vmatprep.subr.mxu0 0.0
    %1163 = vmatpush1.msra.mxu0 0.0
    %1164 = vmatprep.subr.mxu0 0.0
    %1165 = vmatpush1.msra.mxu0 0.0
    %1166 = vmatprep.subr.mxu0 0.0
    %1167 = vmatpush1.msra.mxu0 0.0
    %1168 = vmatprep.subr.mxu0 0.0
    %1169 = vmatpush1.msra.mxu0 0.0
    %1170 = vmatprep.subr.mxu0 0.0
    %1171 = vmatpush1.msra.mxu0 0.0
    %1172 = vmatprep.subr.mxu0 0.0
    %1173 = vmatpush1.msra.mxu0 0.0
    %1174 = vmatprep.subr.mxu0 0.0
    %1175 = vmatpush1.msra.mxu0 0.0
    %1176 = vmatprep.subr.mxu0 0.0
    %1177 = vmatpush1.msra.mxu0 0.0
    %1178 = vmatprep.subr.mxu0 0.0
    %1179 = vmatpush1.msra.mxu0 0.0
    %1180 = vmatprep.subr.mxu0 0.0
    %1181 = vmatpush1.msra.mxu0 0.0
    %1182 = vmatprep.subr.mxu0 0.0
    %1183 = vmatpush1.msra.mxu0 %v1145
    %1184 = vmatprep.subr.mxu0 0.0
    %1185 = vmatpush1.msra.mxu0 %v1143
    %1186 = vmatprep.subr.mxu0 0.0
    %1187 = vmatpush2.msra.mxu0 0.0
    %1188 = vmatprep.subr.mxu0 0.0
    %1189 = vmatpush2.msra.mxu0 0.0
    %1190 = vmatprep.subr.mxu0 0.0
    %1191 = vmatpush2.msra.mxu0 0.0
    %1192 = vmatprep.subr.mxu0 0.0
    %1193 = vmatpush2.msra.mxu0 0.0
    %1194 = vmatprep.subr.mxu0 0.0
    %1195 = vmatpush2.msra.mxu0 0.0
    %1196 = vmatprep.subr.mxu0 0.0
    %1197 = vmatpush2.msra.mxu0 0.0
    %1198 = vmatprep.subr.mxu0 0.0
    %1199 = vmatpush2.msra.mxu0 0.0
    %1200 = vmatprep.subr.mxu0 0.0
    %1201 = vmatpush2.msra.mxu0 0.0
    %1202 = vmatprep.subr.mxu0 0.0
    %1203 = vmatpush2.msra.mxu0 0.0
    %1204 = vmatprep.subr.mxu0 0.0
    %1205 = vmatpush2.msra.mxu0 0.0
    %1206 = vmatprep.subr.mxu0 0.0
    %1207 = vmatpush2.msra.mxu0 0.0
    %1208 = vmatprep.subr.mxu0 0.0
    %1209 = vmatpush2.msra.mxu0 0.0
    %1210 = vmatprep.subr.mxu0 0.0
    %1211 = vmatpush2.msra.mxu0 0.0
    %1212 = vmatprep.subr.mxu0 0.0
    %1213 = vmatpush2.msra.mxu0 0.0
    %1214 = vmatprep.subr.mxu0 0.0
    %1215 = vmatpush2.msra.mxu0 0.0
    %1216 = vmatprep.subr.mxu0 0.0
    %1217 = vmatpush2.msra.mxu0 0.0
    %1218 = vmatprep.mubr.f32.mxu0 0.0
    %1219 = vmatmul.mubr.f32.gmra.mxu0 %v1149
    %v1220 = vpop.f32.mrf.mxu0
    %v1221 = vadd.f32 0.0, %v1220
    %v1222 = vpop.f32.mrf.mxu0
    %1223 = vmatprep.mubr.f32.mxu0 0.0
    %1224 = vmatmul.mubr.f32.gmra.mxu0 %v1152
    %v1225 = vpop.f32.mrf.mxu0
    %v1226 = vadd.f32 0.0, %v1225
    %v1227 = vpop.f32.mrf.mxu0
    %1228 = vdwg.mxu0
    %1231 = vrot.lane.b32.xlu0 %v817, 8
    %v1232 = vpop.permute.xlu0 %1231
    %1233 = vrot.lane.b32.xlu0 %v822, 8
    %v1234 = vpop.permute.xlu0 %1233
    %1239 = vrot.lane.b32.xlu0 %v1019, 16
    %v1240 = vpop.permute.xlu0 %1239
    %1241 = vrot.lane.b32.xlu0 %v1024, 16
    %v1242 = vpop.permute.xlu0 %1241
    %1247 = vrot.lane.b32.xlu0 %v1221, 24
    %v1248 = vpop.permute.xlu0 %1247
    %1249 = vrot.lane.b32.xlu0 %v1226, 24
    %v1250 = vpop.permute.xlu0 %1249
    %v1253 = vsel %vm427, %v613, %v1232
    %v1254 = vsel %vm427, %v618, %v1234
    %v1255 = vsel %vm515, %v1253, %v1240
    %v1256 = vsel %vm515, %v1254, %v1242
    %vm1257 = vcmask 195584
    %v1258 = vsel %vm1257, %v1255, %v1248
    %v1259 = vsel %vm1257, %v1256, %v1250
    %v1260 = vld [vmem:[#allocation13] sm:$0xff]
    %v1261 = vld [vmem:[#allocation13 + $0x8] sm:$0xff]
    %v1262 = vld [vmem:[#allocation13 + $0x10] sm:$0xff]
    %v1263 = vld [vmem:[#allocation13 + $0x18] sm:$0xff]
    %v1264 = vld [vmem:[%s10] sm:$0x1]
    %v1266 = vlaneseq
    %v1267 = vshrl.u32 %v1266, 7
    %v1268 = vsub.s32 0, %v1267
    %v1269 = vrot.slane %v1264, %v1268
    %v1272 = vsel %vm153, %v1258, 0
    %v1275 = vsel %vm153, %v1259, 0
    %1277 = vmatprep.subr.mxu0 0.0
    %1278 = vmatpush1.msra.mxu0 0.0
    %1279 = vmatprep.subr.mxu0 0.0
    %1280 = vmatpush1.msra.mxu0 0.0
    %1281 = vmatprep.subr.mxu0 0.0
    %1282 = vmatpush1.msra.mxu0 0.0
    %1283 = vmatprep.subr.mxu0 0.0
    %1284 = vmatpush1.msra.mxu0 0.0
    %1285 = vmatprep.subr.mxu0 0.0
    %1286 = vmatpush1.msra.mxu0 0.0
    %1287 = vmatprep.subr.mxu0 0.0
    %1288 = vmatpush1.msra.mxu0 0.0
    %1289 = vmatprep.subr.mxu0 0.0
    %1290 = vmatpush1.msra.mxu0 0.0
    %1291 = vmatprep.subr.mxu0 0.0
    %1292 = vmatpush1.msra.mxu0 0.0
    %1293 = vmatprep.subr.mxu0 0.0
    %1294 = vmatpush1.msra.mxu0 0.0
    %1295 = vmatprep.subr.mxu0 0.0
    %1296 = vmatpush1.msra.mxu0 0.0
    %1297 = vmatprep.subr.mxu0 0.0
    %1298 = vmatpush1.msra.mxu0 0.0
    %1299 = vmatprep.subr.mxu0 0.0
    %1300 = vmatpush1.msra.mxu0 0.0
    %1301 = vmatprep.subr.mxu0 0.0
    %1302 = vmatpush1.msra.mxu0 %v1263
    %1303 = vmatprep.subr.mxu0 0.0
    %1304 = vmatpush1.msra.mxu0 %v1262
    %1305 = vmatprep.subr.mxu0 0.0
    %1306 = vmatpush1.msra.mxu0 %v1261
    %1307 = vmatprep.subr.mxu0 0.0
    %1308 = vmatpush1.msra.mxu0 %v1260
    %1309 = vmatprep.subr.mxu0 0.0
    %1310 = vmatpush2.msra.mxu0 0.0
    %1311 = vmatprep.subr.mxu0 0.0
    %1312 = vmatpush2.msra.mxu0 0.0
    %1313 = vmatprep.subr.mxu0 0.0
    %1314 = vmatpush2.msra.mxu0 0.0
    %1315 = vmatprep.subr.mxu0 0.0
    %1316 = vmatpush2.msra.mxu0 0.0
    %1317 = vmatprep.subr.mxu0 0.0
    %1318 = vmatpush2.msra.mxu0 0.0
    %1319 = vmatprep.subr.mxu0 0.0
    %1320 = vmatpush2.msra.mxu0 0.0
    %1321 = vmatprep.subr.mxu0 0.0
    %1322 = vmatpush2.msra.mxu0 0.0
    %1323 = vmatprep.subr.mxu0 0.0
    %1324 = vmatpush2.msra.mxu0 0.0
    %1325 = vmatprep.subr.mxu0 0.0
    %1326 = vmatpush2.msra.mxu0 0.0
    %1327 = vmatprep.subr.mxu0 0.0
    %1328 = vmatpush2.msra.mxu0 0.0
    %1329 = vmatprep.subr.mxu0 0.0
    %1330 = vmatpush2.msra.mxu0 0.0
    %1331 = vmatprep.subr.mxu0 0.0
    %1332 = vmatpush2.msra.mxu0 0.0
    %1333 = vmatprep.subr.mxu0 0.0
    %1334 = vmatpush2.msra.mxu0 0.0
    %1335 = vmatprep.subr.mxu0 0.0
    %1336 = vmatpush2.msra.mxu0 0.0
    %1337 = vmatprep.subr.mxu0 0.0
    %1338 = vmatpush2.msra.mxu0 0.0
    %1339 = vmatprep.subr.mxu0 0.0
    %1340 = vmatpush2.msra.mxu0 0.0
    %1341 = vmatprep.mubr.f32.mxu0 0.0
    %1342 = vmatmul.mubr.f32.gmra.mxu0 %v1272
    %v1343 = vpop.f32.mrf.mxu0
    %v1344 = vadd.f32 %v1269, %v1343
    %v1345 = vpop.f32.mrf.mxu0
    %1346 = vmatprep.mubr.f32.mxu0 0.0
    %1347 = vmatmul.mubr.f32.gmra.mxu0 %v1275
    %v1348 = vpop.f32.mrf.mxu0
    %v1349 = vadd.f32 %v1269, %v1348
    %v1350 = vpop.f32.mrf.mxu0
    %1351 = vdwg.mxu0
    %1352 = vst.msk [vmem:[#allocation14] sm:$0xff] %vm153, %v1344
    %1353 = vst.msk [vmem:[#allocation14 + $0x8] sm:$0xff] %vm153, %v1349
    %v1354 = vmul.f32 %v1140, 0.25
    %v1355 = vmul.f32 %v1141, 0.25
    %v1356 = vlaneseq
    %v1357 = vshrl.u32 %v1356, 7
    %v1358 = vlaneseq
    %v1359 = vand.u32 %v1358, 127
    %v1360 = vadd.s32 %v1357, 8
    %v1361 = vmul.u32 %v1357, 2
    %vm1362 = vcmp.eq.s32.totalorder %v1359, %v1361
    %v1363 = vsel %vm1362, 1, 0
    %v1364 = vcvt.s32.f32 %v1363
    %v1365 = vmul.u32 %v1359, 2
    %vm1366 = vcmp.eq.s32.totalorder %v1357, %v1365
    %vm1367 = vcmp.eq.s32.totalorder %v1360, %v1365
    %v1368 = vsel %vm1366, 1, 0
    %v1369 = vsel %vm1367, 1, 0
    %v1370 = vcvt.s32.f32 %v1368
    %v1371 = vcvt.s32.f32 %v1369
    %v1373 = vsel %vm515, %v1364, 0
    %1375 = vmatprep.subr.mxu0 0.0
    %1376 = vmatpush1.msra.mxu0 0.0
    %1377 = vmatprep.subr.mxu0 0.0
    %1378 = vmatpush1.msra.mxu0 0.0
    %1379 = vmatprep.subr.mxu0 0.0
    %1380 = vmatpush1.msra.mxu0 0.0
    %1381 = vmatprep.subr.mxu0 0.0
    %1382 = vmatpush1.msra.mxu0 0.0
    %1383 = vmatprep.subr.mxu0 0.0
    %1384 = vmatpush1.msra.mxu0 0.0
    %1385 = vmatprep.subr.mxu0 0.0
    %1386 = vmatpush1.msra.mxu0 0.0
    %1387 = vmatprep.subr.mxu0 0.0
    %1388 = vmatpush1.msra.mxu0 0.0
    %1389 = vmatprep.subr.mxu0 0.0
    %1390 = vmatpush1.msra.mxu0 0.0
    %1391 = vmatprep.subr.mxu0 0.0
    %1392 = vmatpush1.msra.mxu0 0.0
    %1393 = vmatprep.subr.mxu0 0.0
    %1394 = vmatpush1.msra.mxu0 0.0
    %1395 = vmatprep.subr.mxu0 0.0
    %1396 = vmatpush1.msra.mxu0 0.0
    %1397 = vmatprep.subr.mxu0 0.0
    %1398 = vmatpush1.msra.mxu0 0.0
    %1399 = vmatprep.subr.mxu0 0.0
    %1400 = vmatpush1.msra.mxu0 0.0
    %1401 = vmatprep.subr.mxu0 0.0
    %1402 = vmatpush1.msra.mxu0 0.0
    %1403 = vmatprep.subr.mxu0 0.0
    %1404 = vmatpush1.msra.mxu0 %v1355
    %1405 = vmatprep.subr.mxu0 0.0
    %1406 = vmatpush1.msra.mxu0 %v1354
    %1407 = vmatprep.subr.mxu0 0.0
    %1408 = vmatpush2.msra.mxu0 0.0
    %1409 = vmatprep.subr.mxu0 0.0
    %1410 = vmatpush2.msra.mxu0 0.0
    %1411 = vmatprep.subr.mxu0 0.0
    %1412 = vmatpush2.msra.mxu0 0.0
    %1413 = vmatprep.subr.mxu0 0.0
    %1414 = vmatpush2.msra.mxu0 0.0
    %1415 = vmatprep.subr.mxu0 0.0
    %1416 = vmatpush2.msra.mxu0 0.0
    %1417 = vmatprep.subr.mxu0 0.0
    %1418 = vmatpush2.msra.mxu0 0.0
    %1419 = vmatprep.subr.mxu0 0.0
    %1420 = vmatpush2.msra.mxu0 0.0
    %1421 = vmatprep.subr.mxu0 0.0
    %1422 = vmatpush2.msra.mxu0 0.0
    %1423 = vmatprep.subr.mxu0 0.0
    %1424 = vmatpush2.msra.mxu0 0.0
    %1425 = vmatprep.subr.mxu0 0.0
    %1426 = vmatpush2.msra.mxu0 0.0
    %1427 = vmatprep.subr.mxu0 0.0
    %1428 = vmatpush2.msra.mxu0 0.0
    %1429 = vmatprep.subr.mxu0 0.0
    %1430 = vmatpush2.msra.mxu0 0.0
    %1431 = vmatprep.subr.mxu0 0.0
    %1432 = vmatpush2.msra.mxu0 0.0
    %1433 = vmatprep.subr.mxu0 0.0
    %1434 = vmatpush2.msra.mxu0 0.0
    %1435 = vmatprep.subr.mxu0 0.0
    %1436 = vmatpush2.msra.mxu0 0.0
    %1437 = vmatprep.subr.mxu0 0.0
    %1438 = vmatpush2.msra.mxu0 0.0
    %1439 = vmatprep.mubr.f32.mxu0 0.0
    %1440 = vmatmul.mubr.f32.gmra.mxu0 %v1373
    %v1441 = vpop.f32.mrf.mxu0
    %v1442 = vadd.f32 0.0, %v1441
    %v1443 = vpop.f32.mrf.mxu0
    %1444 = vdwg.mxu0
    %v1446 = vsel %vm515, %v1442, 0
    %1448 = vmatprep.subr.mxu0 0.0
    %1449 = vmatpush1.msra.mxu0 0.0
    %1450 = vmatprep.subr.mxu0 0.0
    %1451 = vmatpush1.msra.mxu0 0.0
    %1452 = vmatprep.subr.mxu0 0.0
    %1453 = vmatpush1.msra.mxu0 0.0
    %1454 = vmatprep.subr.mxu0 0.0
    %1455 = vmatpush1.msra.mxu0 0.0
    %1456 = vmatprep.subr.mxu0 0.0
    %1457 = vmatpush1.msra.mxu0 0.0
    %1458 = vmatprep.subr.mxu0 0.0
    %1459 = vmatpush1.msra.mxu0 0.0
    %1460 = vmatprep.subr.mxu0 0.0
    %1461 = vmatpush1.msra.mxu0 0.0
    %1462 = vmatprep.subr.mxu0 0.0
    %1463 = vmatpush1.msra.mxu0 0.0
    %1464 = vmatprep.subr.mxu0 0.0
    %1465 = vmatpush1.msra.mxu0 0.0
    %1466 = vmatprep.subr.mxu0 0.0
    %1467 = vmatpush1.msra.mxu0 0.0
    %1468 = vmatprep.subr.mxu0 0.0
    %1469 = vmatpush1.msra.mxu0 0.0
    %1470 = vmatprep.subr.mxu0 0.0
    %1471 = vmatpush1.msra.mxu0 0.0
    %1472 = vmatprep.subr.mxu0 0.0
    %1473 = vmatpush1.msra.mxu0 0.0
    %1474 = vmatprep.subr.mxu0 0.0
    %1475 = vmatpush1.msra.mxu0 0.0
    %1476 = vmatprep.subr.mxu0 0.0
    %1477 = vmatpush1.msra.mxu0 %v1371
    %1478 = vmatprep.subr.mxu0 0.0
    %1479 = vmatpush1.msra.mxu0 %v1370
    %1480 = vmatprep.subr.mxu0 0.0
    %1481 = vmatpush2.msra.mxu0 0.0
    %1482 = vmatprep.subr.mxu0 0.0
    %1483 = vmatpush2.msra.mxu0 0.0
    %1484 = vmatprep.subr.mxu0 0.0
    %1485 = vmatpush2.msra.mxu0 0.0
    %1486 = vmatprep.subr.mxu0 0.0
    %1487 = vmatpush2.msra.mxu0 0.0
    %1488 = vmatprep.subr.mxu0 0.0
    %1489 = vmatpush2.msra.mxu0 0.0
    %1490 = vmatprep.subr.mxu0 0.0
    %1491 = vmatpush2.msra.mxu0 0.0
    %1492 = vmatprep.subr.mxu0 0.0
    %1493 = vmatpush2.msra.mxu0 0.0
    %1494 = vmatprep.subr.mxu0 0.0
    %1495 = vmatpush2.msra.mxu0 0.0
    %1496 = vmatprep.subr.mxu0 0.0
    %1497 = vmatpush2.msra.mxu0 0.0
    %1498 = vmatprep.subr.mxu0 0.0
    %1499 = vmatpush2.msra.mxu0 0.0
    %1500 = vmatprep.subr.mxu0 0.0
    %1501 = vmatpush2.msra.mxu0 0.0
    %1502 = vmatprep.subr.mxu0 0.0
    %1503 = vmatpush2.msra.mxu0 0.0
    %1504 = vmatprep.subr.mxu0 0.0
    %1505 = vmatpush2.msra.mxu0 0.0
    %1506 = vmatprep.subr.mxu0 0.0
    %1507 = vmatpush2.msra.mxu0 0.0
    %1508 = vmatprep.subr.mxu0 0.0
    %1509 = vmatpush2.msra.mxu0 0.0
    %1510 = vmatprep.subr.mxu0 0.0
    %1511 = vmatpush2.msra.mxu0 0.0
    %1512 = vmatprep.mubr.f32.mxu0 0.0
    %1513 = vmatmul.mubr.f32.gmra.mxu0 %v1446
    %v1514 = vpop.f32.mrf.mxu0
    %v1515 = vadd.f32 0.0, %v1514
    %v1516 = vpop.f32.mrf.mxu0
    %1517 = vdwg.mxu0
    %1518 = vst.msk [vmem:[#allocation15] sm:$0xff] %vm427, %v1515
    %v1519 = vadd.s32 %v1361, 1
    %vm1520 = vcmp.eq.s32.totalorder %v1359, %v1519
    %v1521 = vsel %vm1520, 1, 0
    %v1522 = vcvt.s32.f32 %v1521
    %v1523 = vadd.s32 %v1365, 1
    %vm1524 = vcmp.eq.s32.totalorder %v1357, %v1523
    %vm1525 = vcmp.eq.s32.totalorder %v1360, %v1523
    %v1526 = vsel %vm1524, 1, 0
    %v1527 = vsel %vm1525, 1, 0
    %v1528 = vcvt.s32.f32 %v1526
    %v1529 = vcvt.s32.f32 %v1527
    %v1531 = vsel %vm515, %v1522, 0
    %1533 = vmatprep.subr.mxu0 0.0
    %1534 = vmatpush1.msra.mxu0 0.0
    %1535 = vmatprep.subr.mxu0 0.0
    %1536 = vmatpush1.msra.mxu0 0.0
    %1537 = vmatprep.subr.mxu0 0.0
    %1538 = vmatpush1.msra.mxu0 0.0
    %1539 = vmatprep.subr.mxu0 0.0
    %1540 = vmatpush1.msra.mxu0 0.0
    %1541 = vmatprep.subr.mxu0 0.0
    %1542 = vmatpush1.msra.mxu0 0.0
    %1543 = vmatprep.subr.mxu0 0.0
    %1544 = vmatpush1.msra.mxu0 0.0
    %1545 = vmatprep.subr.mxu0 0.0
    %1546 = vmatpush1.msra.mxu0 0.0
    %1547 = vmatprep.subr.mxu0 0.0
    %1548 = vmatpush1.msra.mxu0 0.0
    %1549 = vmatprep.subr.mxu0 0.0
    %1550 = vmatpush1.msra.mxu0 0.0
    %1551 = vmatprep.subr.mxu0 0.0
    %1552 = vmatpush1.msra.mxu0 0.0
    %1553 = vmatprep.subr.mxu0 0.0
    %1554 = vmatpush1.msra.mxu0 0.0
    %1555 = vmatprep.subr.mxu0 0.0
    %1556 = vmatpush1.msra.mxu0 0.0
    %1557 = vmatprep.subr.mxu0 0.0
    %1558 = vmatpush1.msra.mxu0 0.0
    %1559 = vmatprep.subr.mxu0 0.0
    %1560 = vmatpush1.msra.mxu0 0.0
    %1561 = vmatprep.subr.mxu0 0.0
    %1562 = vmatpush1.msra.mxu0 %v1355
    %1563 = vmatprep.subr.mxu0 0.0
    %1564 = vmatpush1.msra.mxu0 %v1354
    %1565 = vmatprep.subr.mxu0 0.0
    %1566 = vmatpush2.msra.mxu0 0.0
    %1567 = vmatprep.subr.mxu0 0.0
    %1568 = vmatpush2.msra.mxu0 0.0
    %1569 = vmatprep.subr.mxu0 0.0
    %1570 = vmatpush2.msra.mxu0 0.0
    %1571 = vmatprep.subr.mxu0 0.0
    %1572 = vmatpush2.msra.mxu0 0.0
    %1573 = vmatprep.subr.mxu0 0.0
    %1574 = vmatpush2.msra.mxu0 0.0
    %1575 = vmatprep.subr.mxu0 0.0
    %1576 = vmatpush2.msra.mxu0 0.0
    %1577 = vmatprep.subr.mxu0 0.0
    %1578 = vmatpush2.msra.mxu0 0.0
    %1579 = vmatprep.subr.mxu0 0.0
    %1580 = vmatpush2.msra.mxu0 0.0
    %1581 = vmatprep.subr.mxu0 0.0
    %1582 = vmatpush2.msra.mxu0 0.0
    %1583 = vmatprep.subr.mxu0 0.0
    %1584 = vmatpush2.msra.mxu0 0.0
    %1585 = vmatprep.subr.mxu0 0.0
    %1586 = vmatpush2.msra.mxu0 0.0
    %1587 = vmatprep.subr.mxu0 0.0
    %1588 = vmatpush2.msra.mxu0 0.0
    %1589 = vmatprep.subr.mxu0 0.0
    %1590 = vmatpush2.msra.mxu0 0.0
    %1591 = vmatprep.subr.mxu0 0.0
    %1592 = vmatpush2.msra.mxu0 0.0
    %1593 = vmatprep.subr.mxu0 0.0
    %1594 = vmatpush2.msra.mxu0 0.0
    %1595 = vmatprep.subr.mxu0 0.0
    %1596 = vmatpush2.msra.mxu0 0.0
    %1597 = vmatprep.mubr.f32.mxu0 0.0
    %1598 = vmatmul.mubr.f32.gmra.mxu0 %v1531
    %v1599 = vpop.f32.mrf.mxu0
    %v1600 = vadd.f32 0.0, %v1599
    %v1601 = vpop.f32.mrf.mxu0
    %1602 = vdwg.mxu0
    %v1604 = vsel %vm515, %v1600, 0
    %1606 = vmatprep.subr.mxu0 0.0
    %1607 = vmatpush1.msra.mxu0 0.0
    %1608 = vmatprep.subr.mxu0 0.0
    %1609 = vmatpush1.msra.mxu0 0.0
    %1610 = vmatprep.subr.mxu0 0.0
    %1611 = vmatpush1.msra.mxu0 0.0
    %1612 = vmatprep.subr.mxu0 0.0
    %1613 = vmatpush1.msra.mxu0 0.0
    %1614 = vmatprep.subr.mxu0 0.0
    %1615 = vmatpush1.msra.mxu0 0.0
    %1616 = vmatprep.subr.mxu0 0.0
    %1617 = vmatpush1.msra.mxu0 0.0
    %1618 = vmatprep.subr.mxu0 0.0
    %1619 = vmatpush1.msra.mxu0 0.0
    %1620 = vmatprep.subr.mxu0 0.0
    %1621 = vmatpush1.msra.mxu0 0.0
    %1622 = vmatprep.subr.mxu0 0.0
    %1623 = vmatpush1.msra.mxu0 0.0
    %1624 = vmatprep.subr.mxu0 0.0
    %1625 = vmatpush1.msra.mxu0 0.0
    %1626 = vmatprep.subr.mxu0 0.0
    %1627 = vmatpush1.msra.mxu0 0.0
    %1628 = vmatprep.subr.mxu0 0.0
    %1629 = vmatpush1.msra.mxu0 0.0
    %1630 = vmatprep.subr.mxu0 0.0
    %1631 = vmatpush1.msra.mxu0 0.0
    %1632 = vmatprep.subr.mxu0 0.0
    %1633 = vmatpush1.msra.mxu0 0.0
    %1634 = vmatprep.subr.mxu0 0.0
    %1635 = vmatpush1.msra.mxu0 %v1529
    %1636 = vmatprep.subr.mxu0 0.0
    %1637 = vmatpush1.msra.mxu0 %v1528
    %1638 = vmatprep.subr.mxu0 0.0
    %1639 = vmatpush2.msra.mxu0 0.0
    %1640 = vmatprep.subr.mxu0 0.0
    %1641 = vmatpush2.msra.mxu0 0.0
    %1642 = vmatprep.subr.mxu0 0.0
    %1643 = vmatpush2.msra.mxu0 0.0
    %1644 = vmatprep.subr.mxu0 0.0
    %1645 = vmatpush2.msra.mxu0 0.0
    %1646 = vmatprep.subr.mxu0 0.0
    %1647 = vmatpush2.msra.mxu0 0.0
    %1648 = vmatprep.subr.mxu0 0.0
    %1649 = vmatpush2.msra.mxu0 0.0
    %1650 = vmatprep.subr.mxu0 0.0
    %1651 = vmatpush2.msra.mxu0 0.0
    %1652 = vmatprep.subr.mxu0 0.0
    %1653 = vmatpush2.msra.mxu0 0.0
    %1654 = vmatprep.subr.mxu0 0.0
    %1655 = vmatpush2.msra.mxu0 0.0
    %1656 = vmatprep.subr.mxu0 0.0
    %1657 = vmatpush2.msra.mxu0 0.0
    %1658 = vmatprep.subr.mxu0 0.0
    %1659 = vmatpush2.msra.mxu0 0.0
    %1660 = vmatprep.subr.mxu0 0.0
    %1661 = vmatpush2.msra.mxu0 0.0
    %1662 = vmatprep.subr.mxu0 0.0
    %1663 = vmatpush2.msra.mxu0 0.0
    %1664 = vmatprep.subr.mxu0 0.0
    %1665 = vmatpush2.msra.mxu0 0.0
    %1666 = vmatprep.subr.mxu0 0.0
    %1667 = vmatpush2.msra.mxu0 0.0
    %1668 = vmatprep.subr.mxu0 0.0
    %1669 = vmatpush2.msra.mxu0 0.0
    %1670 = vmatprep.mubr.f32.mxu0 0.0
    %1671 = vmatmul.mubr.f32.gmra.mxu0 %v1604
    %v1672 = vpop.f32.mrf.mxu0
    %v1673 = vadd.f32 0.0, %v1672
    %v1674 = vpop.f32.mrf.mxu0
    %1675 = vdwg.mxu0
    %s1676 = scalar_lea.vmem [#allocation15], 8
    %1677 = vst.msk [vmem:[%s1676] sm:$0xff] %vm427, %v1673
    // Predicated region
    $region78: #{tpu_custom_call.1} parent=1 // pred_check
      _
    $region79: #{tpu_custom_call.1} parent=1 // pred_check_branch
      %1679 = sbr.rel (0) target = $region81
    $region80: #{tpu_custom_call.1} parent=1 // pred_region
      %s1681 = ssub.s32 256, 256
      %1682 = vsyncadd [#allocation4], %s1681
      %s1683 = sshll.u32 [#allocation14], 4
      %s1684 = int_to_ptr.vmem [resolvable:$true] %s1683
      %1689 = dma.vmem_to_hbm [thread:$0]  %s1684, 256, %s12, [#allocation4], 128, 128, 8
    $region81: #{tpu_custom_call.1} parent=1 // pred_fallthru
      _
    // Predicated region
    $region82: #{tpu_custom_call.1} parent=1 // pred_check
      _
    $region83: #{tpu_custom_call.1} parent=1 // pred_check_branch
      %1691 = sbr.rel (0) target = $region85
    $region84: #{tpu_custom_call.1} parent=1 // pred_region
      %s1693 = ssub.s32 256, 256
      %1694 = vsyncadd [#allocation16], %s1693
      %s1695 = sshll.u32 [#allocation15], 4
      %s1696 = int_to_ptr.vmem [resolvable:$true] %s1695
      %1701 = dma.vmem_to_hbm [thread:$0]  %s1696, 256, %s13, [#allocation16], 128, 128, 8
    $region85: #{tpu_custom_call.1} parent=1 // pred_fallthru
      _
    // Predicated region
    $region86: #{tpu_custom_call.1} parent=1 // pred_check
      _
    $region87: #{tpu_custom_call.1} parent=1 // pred_check_branch
      %1703 = sbr.rel (0) target = $region89
    $region88: #{tpu_custom_call.1} parent=1 // pred_region
      %1704 = dma.done [#allocation4], 256
    $region89: #{tpu_custom_call.1} parent=1 // pred_fallthru
      _
    // Predicated region
    $region90: #{tpu_custom_call.1} parent=1 // pred_check
      _
    $region91: #{tpu_custom_call.1} parent=1 // pred_check_branch
      %1706 = sbr.rel (0) target = $region93
    $region92: #{tpu_custom_call.1} parent=1 // pred_region
      %1707 = dma.done [#allocation16], 256
    $region93: #{tpu_custom_call.1} parent=1 // pred_fallthru
      _
    %1708 = vsyncpa [#allocation3], 1
    %1709 = vsyncpa [#allocation6], 1
    %1710 = vsyncpa [#allocation9], 1
    %1711 = vsyncpa [#allocation12], 1
    %1712 = vsyncpa [#allocation4], 1
    %1713 = vsyncpa [#allocation16], 1

</llo_original>
